<compile_context>
chip_gen: v6e
topology: v6e:2x2x1
jax: 0.10.0
libtpu: 0.0.40
codegen_flags: <defaults>
</compile_context>

<pallas_src>
import functools

import numpy as np
import jax
import jax.numpy as jnp
from jax.experimental import pallas as pl
from jax.experimental.pallas import tpu as pltpu

_EPS = 1e-6  # LayerNorm2d default eps

# Column indices inside the packed per-layer "vecs" matrix (2C, N_VEC).
_N_VEC = 12
(_LN1_W, _LN1_B, _B1, _B2, _BSCA, _B3, _BETA,
 _LN2_W, _LN2_B, _B4, _B5, _GAMMA) = range(_N_VEC)


# --------------------------------------------------------------------------- #
# Pallas kernel: all NAF blocks for one batch element, layer loop in-kernel.
# --------------------------------------------------------------------------- #
def _naf_stack_kernel(x_ref, w_ref, vec_ref, dwm_ref, out_ref, *, n_layers, width):
    # x_ref    : (1, C, HW)            input activation for this batch element
    # w_ref    : (L, 5*RB, C)          packed 1x1 weights [W1|W4|Wsca|W3|W5], 8-aligned
    # vec_ref  : (L, 2C, N_VEC)        per-channel vectors as columns (zero-padded)
    # dwm_ref  : (L, 9, 2C, HW)        depthwise 3x3 weights with boundary masks folded in
    # out_ref  : (1, C, HW)            output
    c = x_ref.shape[1]
    hw = x_ref.shape[2]
    c2 = 2 * c
    rb = w_ref.shape[1] // 5          # 8-aligned row stride of the packed weight slab

    # Flat-index offsets of the 3x3 taps, row-major (tap = ky*3 + kx).
    offsets = [dy * width + dx for dy in (-1, 0, 1) for dx in (-1, 0, 1)]

    x = x_ref[0]                       # (C, HW) activation carried across layers

    for l in range(n_layers):          # static unroll -> static ref-view weight slices
        w1 = w_ref[l, 0 * rb:0 * rb + c2, :]      # (2C, C)  conv1
        w4 = w_ref[l, 1 * rb:1 * rb + c2, :]      # (2C, C)  conv4
        wsca = w_ref[l, 2 * rb:2 * rb + c, :]     # (C, C)   sca 1x1
        w3 = w_ref[l, 3 * rb:3 * rb + c, :]       # (C, C)   conv3
        w5 = w_ref[l, 4 * rb:4 * rb + c, :]       # (C, C)   conv5
        vec = vec_ref[l]                          # (2C, N_VEC), fits in one vreg

        def col(j, rows=c2):                      # (rows, 1) per-channel column
            return vec[0:rows, j:j + 1]

        def layernorm(v, wgt, b):                 # LayerNorm2d: normalize over channels
            mu = jnp.mean(v, axis=0, keepdims=True)          # native sublane reduce
            d = v - mu
            var = jnp.mean(d * d, axis=0, keepdims=True)
            return wgt * (d * jax.lax.rsqrt(var + _EPS)) + b

        def conv1x1(w, v, b):                     # 1x1 conv == (Cout,Cin) @ (Cin,HW)
            return jnp.dot(w, v, preferred_element_type=jnp.float32) + b

        def dwconv3x3(v):                         # depthwise 3x3, padding=1
            acc = None
            for tap, off in enumerate(offsets):
                shifted = v if off == 0 else pltpu.roll(v, (-off) % hw, axis=1)
                contrib = shifted * dwm_ref[l, tap]   # boundary mask pre-folded into w
                acc = contrib if acc is None else acc + contrib
            return acc + col(_B2)

        # ---- first half of the NAF block ----
        xn = layernorm(x, col(_LN1_W, c), col(_LN1_B, c))     # norm1
        t = conv1x1(w1, xn, col(_B1))                         # conv1 -> (2C, HW)
        t = dwconv3x3(t)                                      # conv2 depthwise 3x3
        g = t[:c] * t[c:]                                     # SimpleGate -> (C, HW)

        pool = jnp.mean(g, axis=1, keepdims=True)             # AdaptiveAvgPool2d(1)
        att = jnp.dot(wsca, pool, preferred_element_type=jnp.float32) + col(_BSCA, c)
        g = g * att                                           # simplified channel attn

        x3 = conv1x1(w3, g, col(_B3, c))                      # conv3 (dropout1 = id)
        y = x + x3 * col(_BETA, c)                            # inp + x * beta

        # ---- second half (FFN) ----
        yn = layernorm(y, col(_LN2_W, c), col(_LN2_B, c))     # norm2
        f = conv1x1(w4, yn, col(_B4))                         # conv4 -> (2C, HW)
        f = f[:c] * f[c:]                                     # SimpleGate
        x5 = conv1x1(w5, f, col(_B5, c))                      # conv5 (dropout2 = id)
        x = y + x5 * col(_GAMMA, c)                           # y + x * gamma

    out_ref[0] = x


def naf_blocks_pallas(x_flat, w_all, vecs, dwm, width):
    n, c, hw = x_flat.shape
    n_layers = w_all.shape[0]
    kernel = functools.partial(_naf_stack_kernel, n_layers=n_layers, width=width)
    return pl.pallas_call(
        kernel,
        out_shape=jax.ShapeDtypeStruct((n, c, hw), jnp.float32),
        grid=(n,),
        in_specs=[
            pl.BlockSpec((1, c, hw), lambda i: (i, 0, 0)),
            # Full weight stacks with constant index_maps: DMA'd into VMEM once.
            pl.BlockSpec(w_all.shape, lambda i: (0, 0, 0)),
            pl.BlockSpec(vecs.shape, lambda i: (0, 0, 0)),
            pl.BlockSpec(dwm.shape, lambda i: (0, 0, 0, 0)),
        ],
        out_specs=pl.BlockSpec((1, c, hw), lambda i: (i, 0, 0)),
        compiler_params=pltpu.CompilerParams(
            dimension_semantics=("parallel",)),
    )(x_flat, w_all, vecs, dwm)


def naf_prox_net_forward(x_nchw, w_all, vecs, dwm):
    """Applies the stack of NAFProxNet blocks (one block per packed layer)."""
    n, c, h, w = x_nchw.shape
    x_flat = x_nchw.reshape(n, c, h * w)   # NCHW is already channels-first
    out = naf_blocks_pallas(x_flat, w_all, vecs, dwm, w)
    return out.reshape(n, c, h, w)


# --------------------------------------------------------------------------- #
# Parameter setup & packing (plain JAX / numpy glue)
# --------------------------------------------------------------------------- #
def init_block_params(key, c):
    ks = jax.random.split(key, 18)
    rnd = lambda k, shape, s=0.3: s * jax.random.normal(k, shape, jnp.float32)
    return dict(
        ln1_w=1.0 + rnd(ks[0], (c,), 0.1), ln1_b=rnd(ks[1], (c,), 0.1),
        W1=rnd(ks[2], (2 * c, c)), b1=rnd(ks[3], (2 * c,), 0.1),
        W2=rnd(ks[4], (2 * c, 3, 3)), b2=rnd(ks[5], (2 * c,), 0.1),
        Wsca=rnd(ks[6], (c, c)), bsca=rnd(ks[7], (c,), 0.1),
        W3=rnd(ks[8], (c, c)), b3=rnd(ks[9], (c,), 0.1),
        beta=rnd(ks[10], (c,), 0.5),
        ln2_w=1.0 + rnd(ks[11], (c,), 0.1), ln2_b=rnd(ks[12], (c,), 0.1),
        W4=rnd(ks[13], (2 * c, c)), b4=rnd(ks[14], (2 * c,), 0.1),
        W5=rnd(ks[15], (c, c)), b5=rnd(ks[16], (c,), 0.1),
        gamma=rnd(ks[17], (c,), 0.5),
    )


def pack_params(blocks, c, taps):
    """Packs per-block params into (L,5*RB,C) weights, (L,2C,12) vectors and
    pre-masked depthwise weights (L,9,2C,HW)."""
    c2 = 2 * c
    rb = max(8, -(-c2 // 8) * 8)          # 8-aligned row slot for each 1x1 weight

    def slot(w):
        w = jnp.asarray(w, jnp.float32)
        return jnp.pad(w, ((0, rb - w.shape[0]), (0, 0)))

    def pad_col(v):
        v = jnp.asarray(v, jnp.float32)
        if v.shape[0] < c2:
            v = jnp.concatenate([v, jnp.zeros((c2 - v.shape[0],), jnp.float32)])
        return v

    w_all, vecs, dwm = [], [], []
    for p in blocks:
        w_all.append(jnp.concatenate(
            [slot(p["W1"]), slot(p["W4"]), slot(p["Wsca"]),
             slot(p["W3"]), slot(p["W5"])], axis=0))                 # (5*RB, C)
        vecs.append(jnp.stack(
            [pad_col(p[k]) for k in
             ("ln1_w", "ln1_b", "b1", "b2", "bsca", "b3", "beta",
              "ln2_w", "ln2_b", "b4", "b5", "gamma")], axis=1))      # (2C, N_VEC)
        dw2 = jnp.asarray(p["W2"], jnp.float32).reshape(c2, 9)       # tap = ky*3 + kx
        dwm.append(dw2.T[:, :, None] * taps[:, None, :])             # (9, 2C, HW)
    return (jnp.stack(w_all).astype(jnp.float32),
            jnp.stack(vecs).astype(jnp.float32),
            jnp.stack(dwm).astype(jnp.float32))


def build_tap_masks(h, w):
    """mask[tap, h*W+w] = 1 iff (h+dy, w+dx) is inside the image (padding=1)."""
    masks = np.zeros((9, h * w), np.float32)
    hh = np.arange(h)[:, None]
    ww = np.arange(w)[None, :]
    tap = 0
    for dy in (-1, 0, 1):
        for dx in (-1, 0, 1):
            valid = ((hh + dy >= 0) & (hh + dy < h) &
                     (ww + dx >= 0) & (ww + dx < w))
            masks[tap] = valid.astype(np.float32).reshape(-1)
            tap += 1
    return masks


# --------------------------------------------------------------------------- #
# Pure-JAX NCHW reference, faithful to the PyTorch forward (for verification)
# --------------------------------------------------------------------------- #
def ref_block_nchw(x, p):
    def ln(v, wgt, b):
        mu = jnp.mean(v, axis=1, keepdims=True)
        var = jnp.mean((v - mu) ** 2, axis=1, keepdims=True)
        return wgt[None, :, None, None] * ((v - mu) / jnp.sqrt(var + _EPS)) \
            + b[None, :, None, None]

    def c1x1(v, wgt, b):
        return jnp.einsum("nchw,oc->nohw", v, wgt) + b[None, :, None, None]

    def dwc(v, wgt, b):
        _, _, hh, ww = v.shape
        vp = jnp.pad(v, ((0, 0), (0, 0), (1, 1), (1, 1)))
        out = jnp.zeros_like(v) + b[None, :, None, None]
        for ky in range(3):
            for kx in range(3):
                out = out + vp[:, :, ky:ky + hh, kx:kx + ww] \
                    * wgt[None, :, ky, kx, None, None]
        return out

    def sg(v):
        c2 = v.shape[1] // 2
        return v[:, :c2] * v[:, c2:]

    t = ln(x, p["ln1_w"], p["ln1_b"])
    t = c1x1(t, p["W1"], p["b1"])
    t = dwc(t, p["W2"], p["b2"])
    t = sg(t)
    s = jnp.mean(t, axis=(2, 3), keepdims=True)
    s = jnp.einsum("ncij,oc->noij", s, p["Wsca"]) + p["bsca"][None, :, None, None]
    t = t * s
    t = c1x1(t, p["W3"], p["b3"])
    y = x + t * p["beta"][None, :, None, None]
    t = c1x1(ln(y, p["ln2_w"], p["ln2_b"]), p["W4"], p["b4"])
    t = sg(t)
    t = c1x1(t, p["W5"], p["b5"])
    return y + t * p["gamma"][None, :, None, None]


# --------------------------------------------------------------------------- #
if __name__ == "__main__":
    n_layers, channels = 2, 4
    batch, height, width = 2, 16, 16

    root = jax.random.PRNGKey(0)
    kx, *layer_keys = jax.random.split(root, n_layers + 1)
    x = jax.random.normal(kx, (batch, channels, height, width), jnp.float32)

    blocks = [init_block_params(k, channels) for k in layer_keys]
    taps = jnp.asarray(build_tap_masks(height, width))
    w_all, vecs, dwm = pack_params(blocks, channels, taps)

    fwd = jax.jit(naf_prox_net_forward)
    out = jax.block_until_ready(fwd(x, w_all, vecs, dwm))

    ref = x
    for p in blocks:
        ref = ref_block_nchw(ref, p)
    ref = jax.block_until_ready(ref)

    assert out.shape == x.shape and out.dtype == jnp.float32
    max_err = float(jnp.max(jnp.abs(out - ref)))
    if max_err > 5e-2:
        raise SystemExit(f"Pallas output mismatch vs reference: max|err|={max_err:.3e}")
    print("KERNEL_OK")
</pallas_src>

<mosaic_0001>
module attributes {stable_mosaic.version = 11 : i64} {
  func.func @_naf_stack_kernel(%arg0: i32, %arg1: memref<1x4x256xf32, #tpu.memory_space<vmem>>, %arg2: memref<2x40x4xf32, #tpu.memory_space<vmem>>, %arg3: memref<2x8x12xf32, #tpu.memory_space<vmem>>, %arg4: memref<2x9x8x256xf32, #tpu.memory_space<vmem>>, %arg5: memref<1x4x256xf32, #tpu.memory_space<vmem>>) attributes {dimension_semantics = [#tpu.dimension_semantics<parallel>], iteration_bounds = array<i64: 2>, scalar_prefetch = 0 : i64, scratch_operands = 0 : i64, tpu.core_type = #tpu.core_type<tc>, window_params = [{transform_indices = @transform_0, window_bounds = array<i64: 1, 4, 256>}, {pipeline_mode = #tpu.pipeline_mode<synchronous>, transform_indices = @transform_1, window_bounds = array<i64: 2, 40, 4>}, {pipeline_mode = #tpu.pipeline_mode<synchronous>, transform_indices = @transform_2, window_bounds = array<i64: 2, 8, 12>}, {pipeline_mode = #tpu.pipeline_mode<synchronous>, transform_indices = @transform_3, window_bounds = array<i64: 2, 9, 8, 256>}, {transform_indices = @transform_4, window_bounds = array<i64: 1, 4, 256>}]} {
    %c0 = arith.constant 0 : index
    %c0_0 = arith.constant 0 : index
    %c0_1 = arith.constant 0 : index
    %0 = vector.load %arg1[%c0, %c0_0, %c0_1] : memref<1x4x256xf32, #tpu.memory_space<vmem>>, vector<1x4x256xf32>
    %1 = vector.shape_cast %0 : vector<1x4x256xf32> to vector<4x256xf32>
    %c0_2 = arith.constant 0 : index
    %c0_3 = arith.constant 0 : index
    %c0_4 = arith.constant 0 : index
    %2 = vector.load %arg2[%c0_2, %c0_3, %c0_4] : memref<2x40x4xf32, #tpu.memory_space<vmem>>, vector<1x8x4xf32>
    %3 = vector.shape_cast %2 : vector<1x8x4xf32> to vector<8x4xf32>
    %c0_5 = arith.constant 0 : index
    %c8 = arith.constant 8 : index
    %c0_6 = arith.constant 0 : index
    %4 = vector.load %arg2[%c0_5, %c8, %c0_6] : memref<2x40x4xf32, #tpu.memory_space<vmem>>, vector<1x8x4xf32>
    %5 = vector.shape_cast %4 : vector<1x8x4xf32> to vector<8x4xf32>
    %c0_7 = arith.constant 0 : index
    %c16 = arith.constant 16 : index
    %c0_8 = arith.constant 0 : index
    %6 = vector.load %arg2[%c0_7, %c16, %c0_8] : memref<2x40x4xf32, #tpu.memory_space<vmem>>, vector<1x4x4xf32>
    %7 = vector.shape_cast %6 : vector<1x4x4xf32> to vector<4x4xf32>
    %c0_9 = arith.constant 0 : index
    %c24 = arith.constant 24 : index
    %c0_10 = arith.constant 0 : index
    %8 = vector.load %arg2[%c0_9, %c24, %c0_10] : memref<2x40x4xf32, #tpu.memory_space<vmem>>, vector<1x4x4xf32>
    %9 = vector.shape_cast %8 : vector<1x4x4xf32> to vector<4x4xf32>
    %c0_11 = arith.constant 0 : index
    %c32 = arith.constant 32 : index
    %c0_12 = arith.constant 0 : index
    %10 = vector.load %arg2[%c0_11, %c32, %c0_12] : memref<2x40x4xf32, #tpu.memory_space<vmem>>, vector<1x4x4xf32>
    %11 = vector.shape_cast %10 : vector<1x4x4xf32> to vector<4x4xf32>
    %c0_13 = arith.constant 0 : index
    %c0_14 = arith.constant 0 : index
    %c0_15 = arith.constant 0 : index
    %12 = vector.load %arg3[%c0_13, %c0_14, %c0_15] : memref<2x8x12xf32, #tpu.memory_space<vmem>>, vector<1x8x12xf32>
    %13 = vector.shape_cast %12 : vector<1x8x12xf32> to vector<8x12xf32>
    %14 = vector.extract_strided_slice %13 {offsets = [0, 0], sizes = [4, 1], strides = [1, 1]} : vector<8x12xf32> to vector<4x1xf32>
    %15 = vector.extract_strided_slice %13 {offsets = [0, 1], sizes = [4, 1], strides = [1, 1]} : vector<8x12xf32> to vector<4x1xf32>
    %cst = arith.constant dense<0.000000e+00> : vector<256xf32>
    %16 = vector.multi_reduction <add>, %1, %cst [0] : vector<4x256xf32> to vector<256xf32>
    %17 = vector.shape_cast %16 : vector<256xf32> to vector<1x256xf32>
    %cst_16 = arith.constant 4.000000e+00 : f32
    %18 = vector.broadcast %cst_16 : f32 to vector<1x256xf32>
    %19 = arith.divf %17, %18 : vector<1x256xf32>
    %20 = vector.broadcast %19 : vector<1x256xf32> to vector<4x256xf32>
    %21 = arith.subf %1, %20 : vector<4x256xf32>
    %22 = arith.mulf %21, %21 : vector<4x256xf32>
    %cst_17 = arith.constant dense<0.000000e+00> : vector<256xf32>
    %23 = vector.multi_reduction <add>, %22, %cst_17 [0] : vector<4x256xf32> to vector<256xf32>
    %24 = vector.shape_cast %23 : vector<256xf32> to vector<1x256xf32>
    %cst_18 = arith.constant 4.000000e+00 : f32
    %25 = vector.broadcast %cst_18 : f32 to vector<1x256xf32>
    %26 = arith.divf %24, %25 : vector<1x256xf32>
    %cst_19 = arith.constant 9.99999997E-7 : f32
    %27 = vector.broadcast %cst_19 : f32 to vector<1x256xf32>
    %28 = arith.addf %26, %27 : vector<1x256xf32>
    %29 = math.rsqrt %28 : vector<1x256xf32>
    %30 = vector.broadcast %29 : vector<1x256xf32> to vector<4x256xf32>
    %31 = arith.mulf %21, %30 : vector<4x256xf32>
    %32 = vector.broadcast %14 : vector<4x1xf32> to vector<4x256xf32>
    %33 = arith.mulf %32, %31 : vector<4x256xf32>
    %34 = vector.broadcast %15 : vector<4x1xf32> to vector<4x256xf32>
    %35 = arith.addf %33, %34 : vector<4x256xf32>
    %36 = vector.extract_strided_slice %13 {offsets = [0, 2], sizes = [8, 1], strides = [1, 1]} : vector<8x12xf32> to vector<8x1xf32>
    %cst_20 = arith.constant dense<0.000000e+00> : vector<8x256xf32>
    %37 = tpu.matmul %3, %35, %cst_20 {dimension_numbers = #tpu.dot_dimension_numbers<[1], [0], [0], [1], [0, 0, 1, 1], [], []>} : vector<8x4xf32>, vector<4x256xf32>, vector<8x256xf32> -> vector<8x256xf32>
    %38 = vector.broadcast %36 : vector<8x1xf32> to vector<8x256xf32>
    %39 = arith.addf %37, %38 : vector<8x256xf32>
    %c17_i32 = arith.constant 17 : i32
    %40 = tpu.dynamic_rotate %39 by %c17_i32 dim 1 : vector<8x256xf32>, i32 -> vector<8x256xf32>
    %c0_21 = arith.constant 0 : index
    %c0_22 = arith.constant 0 : index
    %c0_23 = arith.constant 0 : index
    %c0_24 = arith.constant 0 : index
    %41 = vector.load %arg4[%c0_21, %c0_22, %c0_23, %c0_24] : memref<2x9x8x256xf32, #tpu.memory_space<vmem>>, vector<1x1x8x256xf32>
    %42 = vector.shape_cast %41 : vector<1x1x8x256xf32> to vector<8x256xf32>
    %43 = arith.mulf %40, %42 : vector<8x256xf32>
    %c16_i32 = arith.constant 16 : i32
    %44 = tpu.dynamic_rotate %39 by %c16_i32 dim 1 : vector<8x256xf32>, i32 -> vector<8x256xf32>
    %c0_25 = arith.constant 0 : index
    %c1 = arith.constant 1 : index
    %c0_26 = arith.constant 0 : index
    %c0_27 = arith.constant 0 : index
    %45 = vector.load %arg4[%c0_25, %c1, %c0_26, %c0_27] : memref<2x9x8x256xf32, #tpu.memory_space<vmem>>, vector<1x1x8x256xf32>
    %46 = vector.shape_cast %45 : vector<1x1x8x256xf32> to vector<8x256xf32>
    %47 = arith.mulf %44, %46 : vector<8x256xf32>
    %48 = arith.addf %43, %47 : vector<8x256xf32>
    %c15_i32 = arith.constant 15 : i32
    %49 = tpu.dynamic_rotate %39 by %c15_i32 dim 1 : vector<8x256xf32>, i32 -> vector<8x256xf32>
    %c0_28 = arith.constant 0 : index
    %c2 = arith.constant 2 : index
    %c0_29 = arith.constant 0 : index
    %c0_30 = arith.constant 0 : index
    %50 = vector.load %arg4[%c0_28, %c2, %c0_29, %c0_30] : memref<2x9x8x256xf32, #tpu.memory_space<vmem>>, vector<1x1x8x256xf32>
    %51 = vector.shape_cast %50 : vector<1x1x8x256xf32> to vector<8x256xf32>
    %52 = arith.mulf %49, %51 : vector<8x256xf32>
    %53 = arith.addf %48, %52 : vector<8x256xf32>
    %c1_i32 = arith.constant 1 : i32
    %54 = tpu.dynamic_rotate %39 by %c1_i32 dim 1 : vector<8x256xf32>, i32 -> vector<8x256xf32>
    %c0_31 = arith.constant 0 : index
    %c3 = arith.constant 3 : index
    %c0_32 = arith.constant 0 : index
    %c0_33 = arith.constant 0 : index
    %55 = vector.load %arg4[%c0_31, %c3, %c0_32, %c0_33] : memref<2x9x8x256xf32, #tpu.memory_space<vmem>>, vector<1x1x8x256xf32>
    %56 = vector.shape_cast %55 : vector<1x1x8x256xf32> to vector<8x256xf32>
    %57 = arith.mulf %54, %56 : vector<8x256xf32>
    %58 = arith.addf %53, %57 : vector<8x256xf32>
    %c0_34 = arith.constant 0 : index
    %c4 = arith.constant 4 : index
    %c0_35 = arith.constant 0 : index
    %c0_36 = arith.constant 0 : index
    %59 = vector.load %arg4[%c0_34, %c4, %c0_35, %c0_36] : memref<2x9x8x256xf32, #tpu.memory_space<vmem>>, vector<1x1x8x256xf32>
    %60 = vector.shape_cast %59 : vector<1x1x8x256xf32> to vector<8x256xf32>
    %61 = arith.mulf %39, %60 : vector<8x256xf32>
    %62 = arith.addf %58, %61 : vector<8x256xf32>
    %c255_i32 = arith.constant 255 : i32
    %63 = tpu.dynamic_rotate %39 by %c255_i32 dim 1 : vector<8x256xf32>, i32 -> vector<8x256xf32>
    %c0_37 = arith.constant 0 : index
    %c5 = arith.constant 5 : index
    %c0_38 = arith.constant 0 : index
    %c0_39 = arith.constant 0 : index
    %64 = vector.load %arg4[%c0_37, %c5, %c0_38, %c0_39] : memref<2x9x8x256xf32, #tpu.memory_space<vmem>>, vector<1x1x8x256xf32>
    %65 = vector.shape_cast %64 : vector<1x1x8x256xf32> to vector<8x256xf32>
    %66 = arith.mulf %63, %65 : vector<8x256xf32>
    %67 = arith.addf %62, %66 : vector<8x256xf32>
    %c241_i32 = arith.constant 241 : i32
    %68 = tpu.dynamic_rotate %39 by %c241_i32 dim 1 : vector<8x256xf32>, i32 -> vector<8x256xf32>
    %c0_40 = arith.constant 0 : index
    %c6 = arith.constant 6 : index
    %c0_41 = arith.constant 0 : index
    %c0_42 = arith.constant 0 : index
    %69 = vector.load %arg4[%c0_40, %c6, %c0_41, %c0_42] : memref<2x9x8x256xf32, #tpu.memory_space<vmem>>, vector<1x1x8x256xf32>
    %70 = vector.shape_cast %69 : vector<1x1x8x256xf32> to vector<8x256xf32>
    %71 = arith.mulf %68, %70 : vector<8x256xf32>
    %72 = arith.addf %67, %71 : vector<8x256xf32>
    %c240_i32 = arith.constant 240 : i32
    %73 = tpu.dynamic_rotate %39 by %c240_i32 dim 1 : vector<8x256xf32>, i32 -> vector<8x256xf32>
    %c0_43 = arith.constant 0 : index
    %c7 = arith.constant 7 : index
    %c0_44 = arith.constant 0 : index
    %c0_45 = arith.constant 0 : index
    %74 = vector.load %arg4[%c0_43, %c7, %c0_44, %c0_45] : memref<2x9x8x256xf32, #tpu.memory_space<vmem>>, vector<1x1x8x256xf32>
    %75 = vector.shape_cast %74 : vector<1x1x8x256xf32> to vector<8x256xf32>
    %76 = arith.mulf %73, %75 : vector<8x256xf32>
    %77 = arith.addf %72, %76 : vector<8x256xf32>
    %c239_i32 = arith.constant 239 : i32
    %78 = tpu.dynamic_rotate %39 by %c239_i32 dim 1 : vector<8x256xf32>, i32 -> vector<8x256xf32>
    %c0_46 = arith.constant 0 : index
    %c8_47 = arith.constant 8 : index
    %c0_48 = arith.constant 0 : index
    %c0_49 = arith.constant 0 : index
    %79 = vector.load %arg4[%c0_46, %c8_47, %c0_48, %c0_49] : memref<2x9x8x256xf32, #tpu.memory_space<vmem>>, vector<1x1x8x256xf32>
    %80 = vector.shape_cast %79 : vector<1x1x8x256xf32> to vector<8x256xf32>
    %81 = arith.mulf %78, %80 : vector<8x256xf32>
    %82 = arith.addf %77, %81 : vector<8x256xf32>
    %83 = vector.extract_strided_slice %13 {offsets = [0, 3], sizes = [8, 1], strides = [1, 1]} : vector<8x12xf32> to vector<8x1xf32>
    %84 = vector.broadcast %83 : vector<8x1xf32> to vector<8x256xf32>
    %85 = arith.addf %82, %84 : vector<8x256xf32>
    %86 = vector.extract_strided_slice %85 {offsets = [0, 0], sizes = [4, 256], strides = [1, 1]} : vector<8x256xf32> to vector<4x256xf32>
    %87 = vector.extract_strided_slice %85 {offsets = [4, 0], sizes = [4, 256], strides = [1, 1]} : vector<8x256xf32> to vector<4x256xf32>
    %88 = arith.mulf %86, %87 : vector<4x256xf32>
    %cst_50 = arith.constant dense<0.000000e+00> : vector<4xf32>
    %89 = vector.multi_reduction <add>, %88, %cst_50 [1] : vector<4x256xf32> to vector<4xf32>
    %90 = vector.shape_cast %89 : vector<4xf32> to vector<4x1xf32>
    %cst_51 = arith.constant 2.560000e+02 : f32
    %91 = vector.broadcast %cst_51 : f32 to vector<4x1xf32>
    %92 = arith.divf %90, %91 : vector<4x1xf32>
    %cst_52 = arith.constant dense<0.000000e+00> : vector<4x1xf32>
    %93 = tpu.matmul %7, %92, %cst_52 {dimension_numbers = #tpu.dot_dimension_numbers<[1], [0], [0], [1], [0, 0, 1, 1], [], []>} : vector<4x4xf32>, vector<4x1xf32>, vector<4x1xf32> -> vector<4x1xf32>
    %94 = vector.extract_strided_slice %13 {offsets = [0, 4], sizes = [4, 1], strides = [1, 1]} : vector<8x12xf32> to vector<4x1xf32>
    %95 = arith.addf %93, %94 : vector<4x1xf32>
    %96 = vector.broadcast %95 : vector<4x1xf32> to vector<4x256xf32>
    %97 = arith.mulf %88, %96 : vector<4x256xf32>
    %98 = vector.extract_strided_slice %13 {offsets = [0, 5], sizes = [4, 1], strides = [1, 1]} : vector<8x12xf32> to vector<4x1xf32>
    %cst_53 = arith.constant dense<0.000000e+00> : vector<4x256xf32>
    %99 = tpu.matmul %9, %97, %cst_53 {dimension_numbers = #tpu.dot_dimension_numbers<[1], [0], [0], [1], [0, 0, 1, 1], [], []>} : vector<4x4xf32>, vector<4x256xf32>, vector<4x256xf32> -> vector<4x256xf32>
    %100 = vector.broadcast %98 : vector<4x1xf32> to vector<4x256xf32>
    %101 = arith.addf %99, %100 : vector<4x256xf32>
    %102 = vector.extract_strided_slice %13 {offsets = [0, 6], sizes = [4, 1], strides = [1, 1]} : vector<8x12xf32> to vector<4x1xf32>
    %103 = vector.broadcast %102 : vector<4x1xf32> to vector<4x256xf32>
    %104 = arith.mulf %101, %103 : vector<4x256xf32>
    %105 = arith.addf %1, %104 : vector<4x256xf32>
    %106 = vector.extract_strided_slice %13 {offsets = [0, 7], sizes = [4, 1], strides = [1, 1]} : vector<8x12xf32> to vector<4x1xf32>
    %107 = vector.extract_strided_slice %13 {offsets = [0, 8], sizes = [4, 1], strides = [1, 1]} : vector<8x12xf32> to vector<4x1xf32>
    %cst_54 = arith.constant dense<0.000000e+00> : vector<256xf32>
    %108 = vector.multi_reduction <add>, %105, %cst_54 [0] : vector<4x256xf32> to vector<256xf32>
    %109 = vector.shape_cast %108 : vector<256xf32> to vector<1x256xf32>
    %cst_55 = arith.constant 4.000000e+00 : f32
    %110 = vector.broadcast %cst_55 : f32 to vector<1x256xf32>
    %111 = arith.divf %109, %110 : vector<1x256xf32>
    %112 = vector.broadcast %111 : vector<1x256xf32> to vector<4x256xf32>
    %113 = arith.subf %105, %112 : vector<4x256xf32>
    %114 = arith.mulf %113, %113 : vector<4x256xf32>
    %cst_56 = arith.constant dense<0.000000e+00> : vector<256xf32>
    %115 = vector.multi_reduction <add>, %114, %cst_56 [0] : vector<4x256xf32> to vector<256xf32>
    %116 = vector.shape_cast %115 : vector<256xf32> to vector<1x256xf32>
    %cst_57 = arith.constant 4.000000e+00 : f32
    %117 = vector.broadcast %cst_57 : f32 to vector<1x256xf32>
    %118 = arith.divf %116, %117 : vector<1x256xf32>
    %cst_58 = arith.constant 9.99999997E-7 : f32
    %119 = vector.broadcast %cst_58 : f32 to vector<1x256xf32>
    %120 = arith.addf %118, %119 : vector<1x256xf32>
    %121 = math.rsqrt %120 : vector<1x256xf32>
    %122 = vector.broadcast %121 : vector<1x256xf32> to vector<4x256xf32>
    %123 = arith.mulf %113, %122 : vector<4x256xf32>
    %124 = vector.broadcast %106 : vector<4x1xf32> to vector<4x256xf32>
    %125 = arith.mulf %124, %123 : vector<4x256xf32>
    %126 = vector.broadcast %107 : vector<4x1xf32> to vector<4x256xf32>
    %127 = arith.addf %125, %126 : vector<4x256xf32>
    %128 = vector.extract_strided_slice %13 {offsets = [0, 9], sizes = [8, 1], strides = [1, 1]} : vector<8x12xf32> to vector<8x1xf32>
    %cst_59 = arith.constant dense<0.000000e+00> : vector<8x256xf32>
    %129 = tpu.matmul %5, %127, %cst_59 {dimension_numbers = #tpu.dot_dimension_numbers<[1], [0], [0], [1], [0, 0, 1, 1], [], []>} : vector<8x4xf32>, vector<4x256xf32>, vector<8x256xf32> -> vector<8x256xf32>
    %130 = vector.broadcast %128 : vector<8x1xf32> to vector<8x256xf32>
    %131 = arith.addf %129, %130 : vector<8x256xf32>
    %132 = vector.extract_strided_slice %131 {offsets = [0, 0], sizes = [4, 256], strides = [1, 1]} : vector<8x256xf32> to vector<4x256xf32>
    %133 = vector.extract_strided_slice %131 {offsets = [4, 0], sizes = [4, 256], strides = [1, 1]} : vector<8x256xf32> to vector<4x256xf32>
    %134 = arith.mulf %132, %133 : vector<4x256xf32>
    %135 = vector.extract_strided_slice %13 {offsets = [0, 10], sizes = [4, 1], strides = [1, 1]} : vector<8x12xf32> to vector<4x1xf32>
    %cst_60 = arith.constant dense<0.000000e+00> : vector<4x256xf32>
    %136 = tpu.matmul %11, %134, %cst_60 {dimension_numbers = #tpu.dot_dimension_numbers<[1], [0], [0], [1], [0, 0, 1, 1], [], []>} : vector<4x4xf32>, vector<4x256xf32>, vector<4x256xf32> -> vector<4x256xf32>
    %137 = vector.broadcast %135 : vector<4x1xf32> to vector<4x256xf32>
    %138 = arith.addf %136, %137 : vector<4x256xf32>
    %139 = vector.extract_strided_slice %13 {offsets = [0, 11], sizes = [4, 1], strides = [1, 1]} : vector<8x12xf32> to vector<4x1xf32>
    %140 = vector.broadcast %139 : vector<4x1xf32> to vector<4x256xf32>
    %141 = arith.mulf %138, %140 : vector<4x256xf32>
    %142 = arith.addf %105, %141 : vector<4x256xf32>
    %c1_61 = arith.constant 1 : index
    %c0_62 = arith.constant 0 : index
    %c0_63 = arith.constant 0 : index
    %143 = vector.load %arg2[%c1_61, %c0_62, %c0_63] : memref<2x40x4xf32, #tpu.memory_space<vmem>>, vector<1x8x4xf32>
    %144 = vector.shape_cast %143 : vector<1x8x4xf32> to vector<8x4xf32>
    %c1_64 = arith.constant 1 : index
    %c8_65 = arith.constant 8 : index
    %c0_66 = arith.constant 0 : index
    %145 = vector.load %arg2[%c1_64, %c8_65, %c0_66] : memref<2x40x4xf32, #tpu.memory_space<vmem>>, vector<1x8x4xf32>
    %146 = vector.shape_cast %145 : vector<1x8x4xf32> to vector<8x4xf32>
    %c1_67 = arith.constant 1 : index
    %c16_68 = arith.constant 16 : index
    %c0_69 = arith.constant 0 : index
    %147 = vector.load %arg2[%c1_67, %c16_68, %c0_69] : memref<2x40x4xf32, #tpu.memory_space<vmem>>, vector<1x4x4xf32>
    %148 = vector.shape_cast %147 : vector<1x4x4xf32> to vector<4x4xf32>
    %c1_70 = arith.constant 1 : index
    %c24_71 = arith.constant 24 : index
    %c0_72 = arith.constant 0 : index
    %149 = vector.load %arg2[%c1_70, %c24_71, %c0_72] : memref<2x40x4xf32, #tpu.memory_space<vmem>>, vector<1x4x4xf32>
    %150 = vector.shape_cast %149 : vector<1x4x4xf32> to vector<4x4xf32>
    %c1_73 = arith.constant 1 : index
    %c32_74 = arith.constant 32 : index
    %c0_75 = arith.constant 0 : index
    %151 = vector.load %arg2[%c1_73, %c32_74, %c0_75] : memref<2x40x4xf32, #tpu.memory_space<vmem>>, vector<1x4x4xf32>
    %152 = vector.shape_cast %151 : vector<1x4x4xf32> to vector<4x4xf32>
    %c1_76 = arith.constant 1 : index
    %c0_77 = arith.constant 0 : index
    %c0_78 = arith.constant 0 : index
    %153 = vector.load %arg3[%c1_76, %c0_77, %c0_78] : memref<2x8x12xf32, #tpu.memory_space<vmem>>, vector<1x8x12xf32>
    %154 = vector.shape_cast %153 : vector<1x8x12xf32> to vector<8x12xf32>
    %155 = vector.extract_strided_slice %154 {offsets = [0, 0], sizes = [4, 1], strides = [1, 1]} : vector<8x12xf32> to vector<4x1xf32>
    %156 = vector.extract_strided_slice %154 {offsets = [0, 1], sizes = [4, 1], strides = [1, 1]} : vector<8x12xf32> to vector<4x1xf32>
    %cst_79 = arith.constant dense<0.000000e+00> : vector<256xf32>
    %157 = vector.multi_reduction <add>, %142, %cst_79 [0] : vector<4x256xf32> to vector<256xf32>
    %158 = vector.shape_cast %157 : vector<256xf32> to vector<1x256xf32>
    %cst_80 = arith.constant 4.000000e+00 : f32
    %159 = vector.broadcast %cst_80 : f32 to vector<1x256xf32>
    %160 = arith.divf %158, %159 : vector<1x256xf32>
    %161 = vector.broadcast %160 : vector<1x256xf32> to vector<4x256xf32>
    %162 = arith.subf %142, %161 : vector<4x256xf32>
    %163 = arith.mulf %162, %162 : vector<4x256xf32>
    %cst_81 = arith.constant dense<0.000000e+00> : vector<256xf32>
    %164 = vector.multi_reduction <add>, %163, %cst_81 [0] : vector<4x256xf32> to vector<256xf32>
    %165 = vector.shape_cast %164 : vector<256xf32> to vector<1x256xf32>
    %cst_82 = arith.constant 4.000000e+00 : f32
    %166 = vector.broadcast %cst_82 : f32 to vector<1x256xf32>
    %167 = arith.divf %165, %166 : vector<1x256xf32>
    %cst_83 = arith.constant 9.99999997E-7 : f32
    %168 = vector.broadcast %cst_83 : f32 to vector<1x256xf32>
    %169 = arith.addf %167, %168 : vector<1x256xf32>
    %170 = math.rsqrt %169 : vector<1x256xf32>
    %171 = vector.broadcast %170 : vector<1x256xf32> to vector<4x256xf32>
    %172 = arith.mulf %162, %171 : vector<4x256xf32>
    %173 = vector.broadcast %155 : vector<4x1xf32> to vector<4x256xf32>
    %174 = arith.mulf %173, %172 : vector<4x256xf32>
    %175 = vector.broadcast %156 : vector<4x1xf32> to vector<4x256xf32>
    %176 = arith.addf %174, %175 : vector<4x256xf32>
    %177 = vector.extract_strided_slice %154 {offsets = [0, 2], sizes = [8, 1], strides = [1, 1]} : vector<8x12xf32> to vector<8x1xf32>
    %cst_84 = arith.constant dense<0.000000e+00> : vector<8x256xf32>
    %178 = tpu.matmul %144, %176, %cst_84 {dimension_numbers = #tpu.dot_dimension_numbers<[1], [0], [0], [1], [0, 0, 1, 1], [], []>} : vector<8x4xf32>, vector<4x256xf32>, vector<8x256xf32> -> vector<8x256xf32>
    %179 = vector.broadcast %177 : vector<8x1xf32> to vector<8x256xf32>
    %180 = arith.addf %178, %179 : vector<8x256xf32>
    %c17_i32_85 = arith.constant 17 : i32
    %181 = tpu.dynamic_rotate %180 by %c17_i32_85 dim 1 : vector<8x256xf32>, i32 -> vector<8x256xf32>
    %c1_86 = arith.constant 1 : index
    %c0_87 = arith.constant 0 : index
    %c0_88 = arith.constant 0 : index
    %c0_89 = arith.constant 0 : index
    %182 = vector.load %arg4[%c1_86, %c0_87, %c0_88, %c0_89] : memref<2x9x8x256xf32, #tpu.memory_space<vmem>>, vector<1x1x8x256xf32>
    %183 = vector.shape_cast %182 : vector<1x1x8x256xf32> to vector<8x256xf32>
    %184 = arith.mulf %181, %183 : vector<8x256xf32>
    %c16_i32_90 = arith.constant 16 : i32
    %185 = tpu.dynamic_rotate %180 by %c16_i32_90 dim 1 : vector<8x256xf32>, i32 -> vector<8x256xf32>
    %c1_91 = arith.constant 1 : index
    %c1_92 = arith.constant 1 : index
    %c0_93 = arith.constant 0 : index
    %c0_94 = arith.constant 0 : index
    %186 = vector.load %arg4[%c1_91, %c1_92, %c0_93, %c0_94] : memref<2x9x8x256xf32, #tpu.memory_space<vmem>>, vector<1x1x8x256xf32>
    %187 = vector.shape_cast %186 : vector<1x1x8x256xf32> to vector<8x256xf32>
    %188 = arith.mulf %185, %187 : vector<8x256xf32>
    %189 = arith.addf %184, %188 : vector<8x256xf32>
    %c15_i32_95 = arith.constant 15 : i32
    %190 = tpu.dynamic_rotate %180 by %c15_i32_95 dim 1 : vector<8x256xf32>, i32 -> vector<8x256xf32>
    %c1_96 = arith.constant 1 : index
    %c2_97 = arith.constant 2 : index
    %c0_98 = arith.constant 0 : index
    %c0_99 = arith.constant 0 : index
    %191 = vector.load %arg4[%c1_96, %c2_97, %c0_98, %c0_99] : memref<2x9x8x256xf32, #tpu.memory_space<vmem>>, vector<1x1x8x256xf32>
    %192 = vector.shape_cast %191 : vector<1x1x8x256xf32> to vector<8x256xf32>
    %193 = arith.mulf %190, %192 : vector<8x256xf32>
    %194 = arith.addf %189, %193 : vector<8x256xf32>
    %c1_i32_100 = arith.constant 1 : i32
    %195 = tpu.dynamic_rotate %180 by %c1_i32_100 dim 1 : vector<8x256xf32>, i32 -> vector<8x256xf32>
    %c1_101 = arith.constant 1 : index
    %c3_102 = arith.constant 3 : index
    %c0_103 = arith.constant 0 : index
    %c0_104 = arith.constant 0 : index
    %196 = vector.load %arg4[%c1_101, %c3_102, %c0_103, %c0_104] : memref<2x9x8x256xf32, #tpu.memory_space<vmem>>, vector<1x1x8x256xf32>
    %197 = vector.shape_cast %196 : vector<1x1x8x256xf32> to vector<8x256xf32>
    %198 = arith.mulf %195, %197 : vector<8x256xf32>
    %199 = arith.addf %194, %198 : vector<8x256xf32>
    %c1_105 = arith.constant 1 : index
    %c4_106 = arith.constant 4 : index
    %c0_107 = arith.constant 0 : index
    %c0_108 = arith.constant 0 : index
    %200 = vector.load %arg4[%c1_105, %c4_106, %c0_107, %c0_108] : memref<2x9x8x256xf32, #tpu.memory_space<vmem>>, vector<1x1x8x256xf32>
    %201 = vector.shape_cast %200 : vector<1x1x8x256xf32> to vector<8x256xf32>
    %202 = arith.mulf %180, %201 : vector<8x256xf32>
    %203 = arith.addf %199, %202 : vector<8x256xf32>
    %c255_i32_109 = arith.constant 255 : i32
    %204 = tpu.dynamic_rotate %180 by %c255_i32_109 dim 1 : vector<8x256xf32>, i32 -> vector<8x256xf32>
    %c1_110 = arith.constant 1 : index
    %c5_111 = arith.constant 5 : index
    %c0_112 = arith.constant 0 : index
    %c0_113 = arith.constant 0 : index
    %205 = vector.load %arg4[%c1_110, %c5_111, %c0_112, %c0_113] : memref<2x9x8x256xf32, #tpu.memory_space<vmem>>, vector<1x1x8x256xf32>
    %206 = vector.shape_cast %205 : vector<1x1x8x256xf32> to vector<8x256xf32>
    %207 = arith.mulf %204, %206 : vector<8x256xf32>
    %208 = arith.addf %203, %207 : vector<8x256xf32>
    %c241_i32_114 = arith.constant 241 : i32
    %209 = tpu.dynamic_rotate %180 by %c241_i32_114 dim 1 : vector<8x256xf32>, i32 -> vector<8x256xf32>
    %c1_115 = arith.constant 1 : index
    %c6_116 = arith.constant 6 : index
    %c0_117 = arith.constant 0 : index
    %c0_118 = arith.constant 0 : index
    %210 = vector.load %arg4[%c1_115, %c6_116, %c0_117, %c0_118] : memref<2x9x8x256xf32, #tpu.memory_space<vmem>>, vector<1x1x8x256xf32>
    %211 = vector.shape_cast %210 : vector<1x1x8x256xf32> to vector<8x256xf32>
    %212 = arith.mulf %209, %211 : vector<8x256xf32>
    %213 = arith.addf %208, %212 : vector<8x256xf32>
    %c240_i32_119 = arith.constant 240 : i32
    %214 = tpu.dynamic_rotate %180 by %c240_i32_119 dim 1 : vector<8x256xf32>, i32 -> vector<8x256xf32>
    %c1_120 = arith.constant 1 : index
    %c7_121 = arith.constant 7 : index
    %c0_122 = arith.constant 0 : index
    %c0_123 = arith.constant 0 : index
    %215 = vector.load %arg4[%c1_120, %c7_121, %c0_122, %c0_123] : memref<2x9x8x256xf32, #tpu.memory_space<vmem>>, vector<1x1x8x256xf32>
    %216 = vector.shape_cast %215 : vector<1x1x8x256xf32> to vector<8x256xf32>
    %217 = arith.mulf %214, %216 : vector<8x256xf32>
    %218 = arith.addf %213, %217 : vector<8x256xf32>
    %c239_i32_124 = arith.constant 239 : i32
    %219 = tpu.dynamic_rotate %180 by %c239_i32_124 dim 1 : vector<8x256xf32>, i32 -> vector<8x256xf32>
    %c1_125 = arith.constant 1 : index
    %c8_126 = arith.constant 8 : index
    %c0_127 = arith.constant 0 : index
    %c0_128 = arith.constant 0 : index
    %220 = vector.load %arg4[%c1_125, %c8_126, %c0_127, %c0_128] : memref<2x9x8x256xf32, #tpu.memory_space<vmem>>, vector<1x1x8x256xf32>
    %221 = vector.shape_cast %220 : vector<1x1x8x256xf32> to vector<8x256xf32>
    %222 = arith.mulf %219, %221 : vector<8x256xf32>
    %223 = arith.addf %218, %222 : vector<8x256xf32>
    %224 = vector.extract_strided_slice %154 {offsets = [0, 3], sizes = [8, 1], strides = [1, 1]} : vector<8x12xf32> to vector<8x1xf32>
    %225 = vector.broadcast %224 : vector<8x1xf32> to vector<8x256xf32>
    %226 = arith.addf %223, %225 : vector<8x256xf32>
    %227 = vector.extract_strided_slice %226 {offsets = [0, 0], sizes = [4, 256], strides = [1, 1]} : vector<8x256xf32> to vector<4x256xf32>
    %228 = vector.extract_strided_slice %226 {offsets = [4, 0], sizes = [4, 256], strides = [1, 1]} : vector<8x256xf32> to vector<4x256xf32>
    %229 = arith.mulf %227, %228 : vector<4x256xf32>
    %cst_129 = arith.constant dense<0.000000e+00> : vector<4xf32>
    %230 = vector.multi_reduction <add>, %229, %cst_129 [1] : vector<4x256xf32> to vector<4xf32>
    %231 = vector.shape_cast %230 : vector<4xf32> to vector<4x1xf32>
    %cst_130 = arith.constant 2.560000e+02 : f32
    %232 = vector.broadcast %cst_130 : f32 to vector<4x1xf32>
    %233 = arith.divf %231, %232 : vector<4x1xf32>
    %cst_131 = arith.constant dense<0.000000e+00> : vector<4x1xf32>
    %234 = tpu.matmul %148, %233, %cst_131 {dimension_numbers = #tpu.dot_dimension_numbers<[1], [0], [0], [1], [0, 0, 1, 1], [], []>} : vector<4x4xf32>, vector<4x1xf32>, vector<4x1xf32> -> vector<4x1xf32>
    %235 = vector.extract_strided_slice %154 {offsets = [0, 4], sizes = [4, 1], strides = [1, 1]} : vector<8x12xf32> to vector<4x1xf32>
    %236 = arith.addf %234, %235 : vector<4x1xf32>
    %237 = vector.broadcast %236 : vector<4x1xf32> to vector<4x256xf32>
    %238 = arith.mulf %229, %237 : vector<4x256xf32>
    %239 = vector.extract_strided_slice %154 {offsets = [0, 5], sizes = [4, 1], strides = [1, 1]} : vector<8x12xf32> to vector<4x1xf32>
    %cst_132 = arith.constant dense<0.000000e+00> : vector<4x256xf32>
    %240 = tpu.matmul %150, %238, %cst_132 {dimension_numbers = #tpu.dot_dimension_numbers<[1], [0], [0], [1], [0, 0, 1, 1], [], []>} : vector<4x4xf32>, vector<4x256xf32>, vector<4x256xf32> -> vector<4x256xf32>
    %241 = vector.broadcast %239 : vector<4x1xf32> to vector<4x256xf32>
    %242 = arith.addf %240, %241 : vector<4x256xf32>
    %243 = vector.extract_strided_slice %154 {offsets = [0, 6], sizes = [4, 1], strides = [1, 1]} : vector<8x12xf32> to vector<4x1xf32>
    %244 = vector.broadcast %243 : vector<4x1xf32> to vector<4x256xf32>
    %245 = arith.mulf %242, %244 : vector<4x256xf32>
    %246 = arith.addf %142, %245 : vector<4x256xf32>
    %247 = vector.extract_strided_slice %154 {offsets = [0, 7], sizes = [4, 1], strides = [1, 1]} : vector<8x12xf32> to vector<4x1xf32>
    %248 = vector.extract_strided_slice %154 {offsets = [0, 8], sizes = [4, 1], strides = [1, 1]} : vector<8x12xf32> to vector<4x1xf32>
    %cst_133 = arith.constant dense<0.000000e+00> : vector<256xf32>
    %249 = vector.multi_reduction <add>, %246, %cst_133 [0] : vector<4x256xf32> to vector<256xf32>
    %250 = vector.shape_cast %249 : vector<256xf32> to vector<1x256xf32>
    %cst_134 = arith.constant 4.000000e+00 : f32
    %251 = vector.broadcast %cst_134 : f32 to vector<1x256xf32>
    %252 = arith.divf %250, %251 : vector<1x256xf32>
    %253 = vector.broadcast %252 : vector<1x256xf32> to vector<4x256xf32>
    %254 = arith.subf %246, %253 : vector<4x256xf32>
    %255 = arith.mulf %254, %254 : vector<4x256xf32>
    %cst_135 = arith.constant dense<0.000000e+00> : vector<256xf32>
    %256 = vector.multi_reduction <add>, %255, %cst_135 [0] : vector<4x256xf32> to vector<256xf32>
    %257 = vector.shape_cast %256 : vector<256xf32> to vector<1x256xf32>
    %cst_136 = arith.constant 4.000000e+00 : f32
    %258 = vector.broadcast %cst_136 : f32 to vector<1x256xf32>
    %259 = arith.divf %257, %258 : vector<1x256xf32>
    %cst_137 = arith.constant 9.99999997E-7 : f32
    %260 = vector.broadcast %cst_137 : f32 to vector<1x256xf32>
    %261 = arith.addf %259, %260 : vector<1x256xf32>
    %262 = math.rsqrt %261 : vector<1x256xf32>
    %263 = vector.broadcast %262 : vector<1x256xf32> to vector<4x256xf32>
    %264 = arith.mulf %254, %263 : vector<4x256xf32>
    %265 = vector.broadcast %247 : vector<4x1xf32> to vector<4x256xf32>
    %266 = arith.mulf %265, %264 : vector<4x256xf32>
    %267 = vector.broadcast %248 : vector<4x1xf32> to vector<4x256xf32>
    %268 = arith.addf %266, %267 : vector<4x256xf32>
    %269 = vector.extract_strided_slice %154 {offsets = [0, 9], sizes = [8, 1], strides = [1, 1]} : vector<8x12xf32> to vector<8x1xf32>
    %cst_138 = arith.constant dense<0.000000e+00> : vector<8x256xf32>
    %270 = tpu.matmul %146, %268, %cst_138 {dimension_numbers = #tpu.dot_dimension_numbers<[1], [0], [0], [1], [0, 0, 1, 1], [], []>} : vector<8x4xf32>, vector<4x256xf32>, vector<8x256xf32> -> vector<8x256xf32>
    %271 = vector.broadcast %269 : vector<8x1xf32> to vector<8x256xf32>
    %272 = arith.addf %270, %271 : vector<8x256xf32>
    %273 = vector.extract_strided_slice %272 {offsets = [0, 0], sizes = [4, 256], strides = [1, 1]} : vector<8x256xf32> to vector<4x256xf32>
    %274 = vector.extract_strided_slice %272 {offsets = [4, 0], sizes = [4, 256], strides = [1, 1]} : vector<8x256xf32> to vector<4x256xf32>
    %275 = arith.mulf %273, %274 : vector<4x256xf32>
    %276 = vector.extract_strided_slice %154 {offsets = [0, 10], sizes = [4, 1], strides = [1, 1]} : vector<8x12xf32> to vector<4x1xf32>
    %cst_139 = arith.constant dense<0.000000e+00> : vector<4x256xf32>
    %277 = tpu.matmul %152, %275, %cst_139 {dimension_numbers = #tpu.dot_dimension_numbers<[1], [0], [0], [1], [0, 0, 1, 1], [], []>} : vector<4x4xf32>, vector<4x256xf32>, vector<4x256xf32> -> vector<4x256xf32>
    %278 = vector.broadcast %276 : vector<4x1xf32> to vector<4x256xf32>
    %279 = arith.addf %277, %278 : vector<4x256xf32>
    %280 = vector.extract_strided_slice %154 {offsets = [0, 11], sizes = [4, 1], strides = [1, 1]} : vector<8x12xf32> to vector<4x1xf32>
    %281 = vector.broadcast %280 : vector<4x1xf32> to vector<4x256xf32>
    %282 = arith.mulf %279, %281 : vector<4x256xf32>
    %283 = arith.addf %246, %282 : vector<4x256xf32>
    %c0_140 = arith.constant 0 : index
    %c0_141 = arith.constant 0 : index
    %c0_142 = arith.constant 0 : index
    %284 = vector.load %arg5[%c0_140, %c0_141, %c0_142] : memref<1x4x256xf32, #tpu.memory_space<vmem>>, vector<1x4x256xf32>
    %285 = vector.shape_cast %284 : vector<1x4x256xf32> to vector<4x256xf32>
    %286 = vector.shape_cast %283 : vector<4x256xf32> to vector<1x4x256xf32>
    tpu.vector_store %arg5[%c0_140, %c0_141, %c0_142], %286 {strides = array<i32>} : memref<1x4x256xf32, #tpu.memory_space<vmem>>, vector<1x4x256xf32>,
    return
  }
  func.func @transform_0(%arg0: i32) -> (i32, i32, i32) {
    %c0_i32 = arith.constant 0 : i32
    %c0_i32_0 = arith.constant 0 : i32
    %c0_i32_1 = arith.constant 0 : i32
    return %arg0, %c0_i32, %c0_i32_0 : i32, i32, i32
  }
  func.func @transform_1(%arg0: i32) -> (i32, i32, i32) {
    %c0_i32 = arith.constant 0 : i32
    %c0_i32_0 = arith.constant 0 : i32
    %c0_i32_1 = arith.constant 0 : i32
    %c0_i32_2 = arith.constant 0 : i32
    return %c0_i32, %c0_i32_0, %c0_i32_1 : i32, i32, i32
  }
  func.func @transform_2(%arg0: i32) -> (i32, i32, i32) {
    %c0_i32 = arith.constant 0 : i32
    %c0_i32_0 = arith.constant 0 : i32
    %c0_i32_1 = arith.constant 0 : i32
    %c0_i32_2 = arith.constant 0 : i32
    return %c0_i32, %c0_i32_0, %c0_i32_1 : i32, i32, i32
  }
  func.func @transform_3(%arg0: i32) -> (i32, i32, i32, i32) {
    %c0_i32 = arith.constant 0 : i32
    %c0_i32_0 = arith.constant 0 : i32
    %c0_i32_1 = arith.constant 0 : i32
    %c0_i32_2 = arith.constant 0 : i32
    %c0_i32_3 = arith.constant 0 : i32
    return %c0_i32, %c0_i32_0, %c0_i32_1, %c0_i32_2 : i32, i32, i32, i32
  }
  func.func @transform_4(%arg0: i32) -> (i32, i32, i32) {
    %c0_i32 = arith.constant 0 : i32
    %c0_i32_0 = arith.constant 0 : i32
    %c0_i32_1 = arith.constant 0 : i32
    return %arg0, %c0_i32, %c0_i32_0 : i32, i32, i32
  }
}

</mosaic_0001>

<llo_original>
// kernel: naf_prox_net_forward.1
$region0: #{naf_prox_net_forward.1}
  #allocation0 [shape = 'u32[]', space=smem, size = 0x4, offset = 0x4, fixed_abs, tag = 'smem constant byte address 0x4 - core index']
  #allocation1 [shape = 'u32[144,128]{1,0:T(1,128)}', space=vmem, size = 0x12000, scoped, tag = 'internal scratch']
  %s0 = inlined_call_operand.vmem [shape: f32[2,4,256], index: 0, kind: input, shape index: {}]
  %s1 = inlined_call_operand.vmem [shape: f32[2,40,4], index: 1, kind: input, shape index: {}]
  %s2 = inlined_call_operand.vmem [shape: f32[2,8,12], index: 2, kind: input, shape index: {}]
  %s3 = inlined_call_operand.hbm [shape: f32[2,9,8,256], index: 3, kind: input, shape index: {}]
  %s4 = inlined_call_operand.vmem [shape: f32[2,4,256], index: 4, kind: output, shape index: {}]
  %s5 = sld [smem:[#allocation0]]
  $region53: #{naf_prox_net_forward.1} parent=0
    _
  %s7 = ssub.s32 1, %s5
  %s8 = scalar_select 0, %s7, %s5
  $region1: #{naf_prox_net_forward.1} parent=0
    #allocation2 [shape = 'u8[147456]{0}', space=vmem, size = 0x24000, scoped, tag = 'input window, operand 3, single buffered']
    #allocation3 [shape = 's32[2]{0}', space=sflag, size = 0x8, scoped, tag = 'scoped memory for naf_prox_net_forward.1']
    %9 = vsyncpa [#allocation3], 0
    loop: start=0, step=1, limit=4
    $region2: #{naf_prox_net_forward.1} parent=1 // loop_pre_header
      _
    $region3: #{naf_prox_net_forward.1} parent=1 // loop_header
      %s11 = sphi 0, %s15
      %p12 = scmp.ge.s32.totalorder %s11, 4
      %s21 = sphi 0, %s23
      %s24 = sphi 0, %s21
      %s25 = sphi 0, %s24
      %s41 = sphi 0, %s25
      %s45 = sphi 0, %s45
      %s47 = sphi 0, %s45
      %s48 = sphi 0, %s47
      %s62 = sphi 0, %s48
      %s66 = sphi 0, %s66
      %s68 = sphi 0, %s66
      %s69 = sphi 0, %s68
      %s83 = sphi 0, %s69
      %s87 = sphi 0, %s87
      %s89 = sphi 0, %s87
      %s90 = sphi 0, %s89
      %s104 = sphi 0, %s90
      %s110 = sphi 0, %s112
      %s113 = sphi 0, %s110
      %s114 = sphi 0, %s113
      %s130 = sphi 0, %s114
    $region4: #{naf_prox_net_forward.1} parent=1 // loop_header_branch
      %14 = sbr.rel (%p12) target = $region8
    $region5: #{naf_prox_net_forward.1} parent=1 // loop_body
      %s16 = ssub.s32 %s11, 1
      %s17 = ssub.s32 %s11, 2
      %s18 = sadd.s32 %s11, 1
      %s19 = ssub.s32 %s11, %s18
      %p20 = scmp.eq.s32.totalorder %s19, 0
      %s22 = sadd.s32 %s21, 1
      %s23 = scalar_select %p20, %s21, %s22
      %p26 = pneg %p20
      %p27 = scmp.eq.s32.totalorder %s11, 1
      %p28 = por %p26, %p27
      %p29 = scmp.ne.s32.totalorder %s21, %s24
      %p30 = scmp.eq.s32.totalorder %s11, 0
      %p31 = por %p29, %p30
      %p32 = scmp.ne.s32.totalorder %s21, %s24
      %p33 = scmp.eq.s32.totalorder %s16, 1
      %p34 = por %p32, %p33
      %p35 = scmp.ne.s32.totalorder %s24, %s25
      %p36 = scmp.eq.s32.totalorder %s16, 0
      %p37 = por %p35, %p36
      %p38 = scmp.ne.s32.totalorder %s24, %s25
      %p39 = scmp.eq.s32.totalorder %s17, 1
      %p40 = por %p38, %p39
      %p42 = scmp.ne.s32.totalorder %s25, %s41
      %p43 = scmp.eq.s32.totalorder %s17, 0
      %p44 = por %p42, %p43
      %s46 = sadd.s32 %s45, 1
      %p49 = scmp.eq.s32.totalorder %s11, 1
      %p50 = scmp.ne.s32.totalorder %s45, %s47
      %p51 = scmp.eq.s32.totalorder %s11, 0
      %p52 = por %p50, %p51
      %p53 = scmp.ne.s32.totalorder %s45, %s47
      %p54 = scmp.eq.s32.totalorder %s16, 1
      %p55 = por %p53, %p54
      %p56 = scmp.ne.s32.totalorder %s47, %s48
      %p57 = scmp.eq.s32.totalorder %s16, 0
      %p58 = por %p56, %p57
      %p59 = scmp.ne.s32.totalorder %s47, %s48
      %p60 = scmp.eq.s32.totalorder %s17, 1
      %p61 = por %p59, %p60
      %p63 = scmp.ne.s32.totalorder %s48, %s62
      %p64 = scmp.eq.s32.totalorder %s17, 0
      %p65 = por %p63, %p64
      %s67 = sadd.s32 %s66, 1
      %p70 = scmp.eq.s32.totalorder %s11, 1
      %p71 = scmp.ne.s32.totalorder %s66, %s68
      %p72 = scmp.eq.s32.totalorder %s11, 0
      %p73 = por %p71, %p72
      %p74 = scmp.ne.s32.totalorder %s66, %s68
      %p75 = scmp.eq.s32.totalorder %s16, 1
      %p76 = por %p74, %p75
      %p77 = scmp.ne.s32.totalorder %s68, %s69
      %p78 = scmp.eq.s32.totalorder %s16, 0
      %p79 = por %p77, %p78
      %p80 = scmp.ne.s32.totalorder %s68, %s69
      %p81 = scmp.eq.s32.totalorder %s17, 1
      %p82 = por %p80, %p81
      %p84 = scmp.ne.s32.totalorder %s69, %s83
      %p85 = scmp.eq.s32.totalorder %s17, 0
      %p86 = por %p84, %p85
      %s88 = sadd.s32 %s87, 1
      %p91 = scmp.eq.s32.totalorder %s11, 1
      %p92 = scmp.ne.s32.totalorder %s87, %s89
      %p93 = scmp.eq.s32.totalorder %s11, 0
      %p94 = por %p92, %p93
      %p95 = scmp.ne.s32.totalorder %s87, %s89
      %p96 = scmp.eq.s32.totalorder %s16, 1
      %p97 = por %p95, %p96
      %p98 = scmp.ne.s32.totalorder %s89, %s90
      %p99 = scmp.eq.s32.totalorder %s16, 0
      %p100 = por %p98, %p99
      %p101 = scmp.ne.s32.totalorder %s89, %s90
      %p102 = scmp.eq.s32.totalorder %s17, 1
      %p103 = por %p101, %p102
      %p105 = scmp.ne.s32.totalorder %s90, %s104
      %p106 = scmp.eq.s32.totalorder %s17, 0
      %p107 = por %p105, %p106
      %s108 = ssub.s32 %s11, %s18
      %p109 = scmp.eq.s32.totalorder %s108, 0
      %s111 = sadd.s32 %s110, 1
      %s112 = scalar_select %p109, %s110, %s111
      %p115 = pneg %p109
      %p116 = scmp.eq.s32.totalorder %s11, 1
      %p117 = por %p115, %p116
      %p118 = scmp.ne.s32.totalorder %s110, %s113
      %p119 = scmp.eq.s32.totalorder %s11, 0
      %p120 = por %p118, %p119
      %p121 = scmp.ne.s32.totalorder %s110, %s113
      %p122 = scmp.eq.s32.totalorder %s16, 1
      %p123 = por %p121, %p122
      %p124 = scmp.ne.s32.totalorder %s113, %s114
      %p125 = scmp.eq.s32.totalorder %s16, 0
      %p126 = por %p124, %p125
      %p127 = scmp.ne.s32.totalorder %s113, %s114
      %p128 = scmp.eq.s32.totalorder %s17, 1
      %p129 = por %p127, %p128
      %p131 = scmp.ne.s32.totalorder %s114, %s130
      %p132 = scmp.eq.s32.totalorder %s17, 0
      %p133 = por %p131, %p132
      %p134 = scmp.le.s32.totalorder 1, %s11
      %p135 = scmp.lt.s32.totalorder %s11, 3
      %p136 = pnand %p134, %p135
      %p137 = pneg %p136
      // Predicated region
      $region9: #{naf_prox_net_forward.1} parent=5 // pred_check
        _
      $region10: #{naf_prox_net_forward.1} parent=5 // pred_check_branch
        %139 = sbr.rel (%p136) target = $region12
      $region11: #{naf_prox_net_forward.1} parent=5 // pred_region
        %s140 = ssub.s32 %s11, 1
        // Predicated region
        $region13: #{naf_prox_net_forward.1} parent=11 // pred_check
          %p141 = pneg %p58
        $region14: #{naf_prox_net_forward.1} parent=11 // pred_check_branch
          %143 = sbr.rel (%p141) target = $region16
        $region15: #{naf_prox_net_forward.1} parent=11 // pred_region
          _
        $region16: #{naf_prox_net_forward.1} parent=11 // pred_fallthru
          _
        // Predicated region
        $region17: #{naf_prox_net_forward.1} parent=11 // pred_check
          %p144 = pneg %p79
        $region18: #{naf_prox_net_forward.1} parent=11 // pred_check_branch
          %146 = sbr.rel (%p144) target = $region20
        $region19: #{naf_prox_net_forward.1} parent=11 // pred_region
          _
        $region20: #{naf_prox_net_forward.1} parent=11 // pred_fallthru
          _
        // Predicated region
        $region21: #{naf_prox_net_forward.1} parent=11 // pred_check
          %p147 = pneg %p100
        $region22: #{naf_prox_net_forward.1} parent=11 // pred_check_branch
          %149 = sbr.rel (%p147) target = $region24
        $region23: #{naf_prox_net_forward.1} parent=11 // pred_region
          %s151 = ssub.s32 4608, 4608
          %152 = vsyncadd [#allocation3], %s151
          %s153 = sshll.u32 [#allocation2], 4
          %s154 = int_to_ptr.vmem [resolvable:$true] %s153
          %159 = dma.hbm_to_vmem [thread:$0]  %s3, 4608, %s154, [#allocation3], 256, 256, 16
        $region24: #{naf_prox_net_forward.1} parent=11 // pred_fallthru
          _
      $region12: #{naf_prox_net_forward.1} parent=5 // pred_fallthru
        _
      %p160 = scmp.lt.s32.totalorder %s11, 2
      // Predicated region
      $region25: #{naf_prox_net_forward.1} parent=5 // pred_check
        %p161 = pneg %p160
      $region26: #{naf_prox_net_forward.1} parent=5 // pred_check_branch
        %163 = sbr.rel (%p161) target = $region28
      $region27: #{naf_prox_net_forward.1} parent=5 // pred_region
        // Predicated region
        $region29: #{naf_prox_net_forward.1} parent=27 // pred_check
          %p164 = pneg %p31
        $region30: #{naf_prox_net_forward.1} parent=27 // pred_check_branch
          %166 = sbr.rel (%p164) target = $region32
        $region31: #{naf_prox_net_forward.1} parent=27 // pred_region
          %p167 = scmp.lt.s32.totalorder %s11, 1
          %s168 = scalar_select %p167, %s11, 1
          %s169 = smul.addr %s168, 2
          %s170 = smul.addr %s169, 4
          %s171 = scalar_lea.vmem %s0, %s170
        $region32: #{naf_prox_net_forward.1} parent=27 // pred_fallthru
          _
      $region28: #{naf_prox_net_forward.1} parent=5 // pred_fallthru
        _
      %p172 = scmp.le.s32.totalorder 1, %s11
      %p173 = scmp.lt.s32.totalorder %s11, 3
      %p174 = pnand %p172, %p173
      %p175 = pneg %p174
      // Predicated region
      $region33: #{naf_prox_net_forward.1} parent=5 // pred_check
        _
      $region34: #{naf_prox_net_forward.1} parent=5 // pred_check_branch
        %177 = sbr.rel (%p174) target = $region36
      $region35: #{naf_prox_net_forward.1} parent=5 // pred_region
        %s178 = ssub.s32 %s11, 1
        // Predicated region
        $region37: #{naf_prox_net_forward.1} parent=35 // pred_check
          %p179 = pneg %p100
        $region38: #{naf_prox_net_forward.1} parent=35 // pred_check_branch
          %181 = sbr.rel (%p179) target = $region40
        $region39: #{naf_prox_net_forward.1} parent=35 // pred_region
          %182 = dma.done [#allocation3], 4608
        $region40: #{naf_prox_net_forward.1} parent=35 // pred_fallthru
          _
        %p183 = scmp.lt.s32.totalorder %s16, 1
        %s184 = scalar_select %p183, %s16, 1
        %s185 = smul.addr %s184, 2
        %s186 = smul.addr %s185, 4
        %s187 = scalar_lea.vmem %s0, %s186
        %p188 = pneg %p37
        %p189 = pneg %p34
        %p190 = pneg %p58
        %p191 = pneg %p55
        %p192 = pneg %p79
        %p193 = pneg %p76
        %p194 = pneg %p100
        %p195 = pneg %p97
        %p196 = pneg %p126
        %p197 = pneg %p123
        %p198 = scmp.lt.s32.totalorder %s16, 1
        %s199 = scalar_select %p198, %s16, 1
        %s200 = smul.addr %s199, 2
        %s201 = smul.addr %s200, 4
        %s202 = scalar_lea.vmem %s4, %s201
        %p203 = scmp.lt.s32.totalorder %s16, 1
        %s204 = scalar_select %p203, %s16, 1
        %s205 = smul.addr %s204, 2
        %s206 = smul.addr %s205, 4
        %s207 = scalar_lea.vmem %s0, %s206
        %p208 = scmp.lt.s32.totalorder %s16, 1
        %s209 = scalar_select %p208, %s16, 1
        %s210 = smul.addr %s209, 2
        %s211 = smul.addr %s210, 4
        %s212 = scalar_lea.vmem %s4, %s211
        %v213 = vld [vmem:[%s207] sm:$0xff]
        %v214 = vld [vmem:[%s1] sm:$0xff]
        %v215 = vld [vmem:[%s1 + $0x8] sm:$0xff]
        %v216 = vld [vmem:[%s1 + $0x10] sm:$0xf]
        %v217 = vld [vmem:[%s1 + $0x18] sm:$0xf]
        %v218 = vld [vmem:[%s1 + $0x20] sm:$0xf]
        %v219 = vld [vmem:[%s2] sm:$0xff]
        %v221 = vcombine.high %v213, %v213
        %vm223 = vcmask 1043456
        %v224 = vsel %vm223, %v213, 0.0
        %v225 = vrot.slane %v224, 4
        %v226 = vadd.f32 %v224, %v225
        %v227 = vrot.slane %v226, 2
        %v228 = vadd.f32 %v226, %v227
        %v229 = vrot.slane %v228, 1
        %v230 = vadd.f32 %v228, %v229
        %v231 = vsel %vm223, %v221, 0.0
        %v232 = vrot.slane %v231, 4
        %v233 = vadd.f32 %v231, %v232
        %v234 = vrot.slane %v233, 2
        %v235 = vadd.f32 %v233, %v234
        %v236 = vrot.slane %v235, 1
        %v237 = vadd.f32 %v235, %v236
        %v238 = vrcp.pop 4.0
        %v239 = vmul.f32 %v230, %v238
        %v240 = vmul.f32 %v237, %v238
        %v243 = vcombine.low %v239, %v240
        %v245 = vsub.f32 %v213, %v243
        %v246 = vmul.f32 %v245, %v245
        %v248 = vcombine.high %v246, %v246
        %v250 = vsel %vm223, %v246, 0.0
        %v251 = vrot.slane %v250, 4
        %v252 = vadd.f32 %v250, %v251
        %v253 = vrot.slane %v252, 2
        %v254 = vadd.f32 %v252, %v253
        %v255 = vrot.slane %v254, 1
        %v256 = vadd.f32 %v254, %v255
        %v257 = vsel %vm223, %v248, 0.0
        %v258 = vrot.slane %v257, 4
        %v259 = vadd.f32 %v257, %v258
        %v260 = vrot.slane %v259, 2
        %v261 = vadd.f32 %v259, %v260
        %v262 = vrot.slane %v261, 1
        %v263 = vadd.f32 %v261, %v262
        %v264 = vmul.f32 %v256, %v238
        %v265 = vmul.f32 %v263, %v238
        %v266 = vadd.f32 %v264, 1e-06
        %v267 = vadd.f32 %v265, 1e-06
        %v268 = vrsqrt.pop %v266
        %v269 = vrsqrt.pop %v267
        %v272 = vcombine.low %v268, %v269
        %v274 = vmul.f32 %v245, %v272
        %276 = vset.pattern.permute.xlu0 0
        %277 = vperm.xlu0 %276, %v219
        %v278 = vpop.permute.xlu0 %277
        %v281 = vcombine.high %v274, %v274
        %v283 = vmul.f32 %v278, %v274
        %v284 = vmul.f32 %v278, %v281
        %285 = vset.pattern.permute.xlu0 1
        %286 = vperm.xlu0 %285, %v219
        %v287 = vpop.permute.xlu0 %286
        %v289 = vadd.f32 %v283, %v287
        %v290 = vadd.f32 %v284, %v287
        %291 = vset.pattern.permute.xlu0 2
        %292 = vperm.xlu0 %291, %v219
        %v293 = vpop.permute.xlu0 %292
        %vm295 = vcmask 31744
        %v297 = vsel %vm295, %v214, 0
        %v300 = vsel %vm223, %v289, 0
        %v303 = vsel %vm223, %v290, 0
        %305 = vmatprep.subr.mxu0 0.0
        %306 = vmatpush1.msra.mxu0 0.0
        %307 = vmatprep.subr.mxu0 0.0
        %308 = vmatpush1.msra.mxu0 0.0
        %309 = vmatprep.subr.mxu0 0.0
        %310 = vmatpush1.msra.mxu0 0.0
        %311 = vmatprep.subr.mxu0 0.0
        %312 = vmatpush1.msra.mxu0 0.0
        %313 = vmatprep.subr.mxu0 0.0
        %314 = vmatpush1.msra.mxu0 0.0
        %315 = vmatprep.subr.mxu0 0.0
        %316 = vmatpush1.msra.mxu0 0.0
        %317 = vmatprep.subr.mxu0 0.0
        %318 = vmatpush1.msra.mxu0 0.0
        %319 = vmatprep.subr.mxu0 0.0
        %320 = vmatpush1.msra.mxu0 0.0
        %321 = vmatprep.subr.mxu0 0.0
        %322 = vmatpush1.msra.mxu0 0.0
        %323 = vmatprep.subr.mxu0 0.0
        %324 = vmatpush1.msra.mxu0 0.0
        %325 = vmatprep.subr.mxu0 0.0
        %326 = vmatpush1.msra.mxu0 0.0
        %327 = vmatprep.subr.mxu0 0.0
        %328 = vmatpush1.msra.mxu0 0.0
        %329 = vmatprep.subr.mxu0 0.0
        %330 = vmatpush1.msra.mxu0 0.0
        %331 = vmatprep.subr.mxu0 0.0
        %332 = vmatpush1.msra.mxu0 0.0
        %333 = vmatprep.subr.mxu0 0.0
        %334 = vmatpush1.msra.mxu0 0.0
        %335 = vmatprep.subr.mxu0 %v303
        %336 = vmatpush1.msra.mxu0 %v300
        %337 = vmatprep.subr.mxu0 0.0
        %338 = vmatpush2.msra.mxu0 0.0
        %339 = vmatprep.subr.mxu0 0.0
        %340 = vmatpush2.msra.mxu0 0.0
        %341 = vmatprep.subr.mxu0 0.0
        %342 = vmatpush2.msra.mxu0 0.0
        %343 = vmatprep.subr.mxu0 0.0
        %344 = vmatpush2.msra.mxu0 0.0
        %345 = vmatprep.subr.mxu0 0.0
        %346 = vmatpush2.msra.mxu0 0.0
        %347 = vmatprep.subr.mxu0 0.0
        %348 = vmatpush2.msra.mxu0 0.0
        %349 = vmatprep.subr.mxu0 0.0
        %350 = vmatpush2.msra.mxu0 0.0
        %351 = vmatprep.subr.mxu0 0.0
        %352 = vmatpush2.msra.mxu0 0.0
        %353 = vmatprep.subr.mxu0 0.0
        %354 = vmatpush2.msra.mxu0 0.0
        %355 = vmatprep.subr.mxu0 0.0
        %356 = vmatpush2.msra.mxu0 0.0
        %357 = vmatprep.subr.mxu0 0.0
        %358 = vmatpush2.msra.mxu0 0.0
        %359 = vmatprep.subr.mxu0 0.0
        %360 = vmatpush2.msra.mxu0 0.0
        %361 = vmatprep.subr.mxu0 0.0
        %362 = vmatpush2.msra.mxu0 0.0
        %363 = vmatprep.subr.mxu0 0.0
        %364 = vmatpush2.msra.mxu0 0.0
        %365 = vmatprep.subr.mxu0 0.0
        %366 = vmatpush2.msra.mxu0 0.0
        %367 = vmatprep.subr.mxu0 0.0
        %368 = vmatpush2.msra.mxu0 0.0
        %369 = vmatprep.mubr.f32.mxu0 0.0
        %370 = vmatmul.mubr.f32.gmra.mxu0 %v297
        %v371 = vpop.f32.mrf.mxu0
        %v372 = vadd.f32 %v293, %v371
        %v373 = vpop.f32.mrf.mxu0
        %v374 = vadd.f32 %v293, %v373
        %375 = vdwg.mxu0
        %376 = vrot.lane.b32.xlu0 %v372, 17
        %v377 = vpop.permute.xlu0 %376
        %378 = vrot.lane.b32.xlu0 %v374, 17
        %v379 = vpop.permute.xlu0 %378
        %v380 = vlaneseq
        %v381 = vand.u32 %v380, 127
        %vm382 = vcmp.lt.s32.totalorder %v381, 17
        %v383 = vsel %vm382, %v377, %v379
        %v384 = vsel %vm382, %v379, %v377
        %v385 = vld [vmem:[#allocation2] sm:$0xff]
        %v386 = vld [vmem:[#allocation2 + $0x8] sm:$0xff]
        %v387 = vmul.f32 %v384, %v385
        %v388 = vmul.f32 %v383, %v386
        %389 = vrot.lane.b32.xlu0 %v372, 16
        %v390 = vpop.permute.xlu0 %389
        %391 = vrot.lane.b32.xlu0 %v374, 16
        %v392 = vpop.permute.xlu0 %391
        %vm393 = vcmp.lt.s32.totalorder %v381, 16
        %v394 = vsel %vm393, %v390, %v392
        %v395 = vsel %vm393, %v392, %v390
        %s396 = scalar_lea.vmem [#allocation2], 16
        %v397 = vld [vmem:[%s396] sm:$0xff]
        %v398 = vld [vmem:[%s396 + $0x8] sm:$0xff]
        %v399 = vmul.f32 %v395, %v397
        %v400 = vmul.f32 %v394, %v398
        %v401 = vadd.f32 %v387, %v399
        %v402 = vadd.f32 %v388, %v400
        %403 = vrot.lane.b32.xlu0 %v372, 15
        %v404 = vpop.permute.xlu0 %403
        %405 = vrot.lane.b32.xlu0 %v374, 15
        %v406 = vpop.permute.xlu0 %405
        %vm407 = vcmp.lt.s32.totalorder %v381, 15
        %v408 = vsel %vm407, %v404, %v406
        %v409 = vsel %vm407, %v406, %v404
        %s410 = scalar_lea.vmem [#allocation2], 32
        %v411 = vld [vmem:[%s410] sm:$0xff]
        %v412 = vld [vmem:[%s410 + $0x8] sm:$0xff]
        %v413 = vmul.f32 %v409, %v411
        %v414 = vmul.f32 %v408, %v412
        %v415 = vadd.f32 %v401, %v413
        %v416 = vadd.f32 %v402, %v414
        %417 = vrot.lane.b32.xlu0 %v372, 1
        %v418 = vpop.permute.xlu0 %417
        %419 = vrot.lane.b32.xlu0 %v374, 1
        %v420 = vpop.permute.xlu0 %419
        %vm421 = vcmp.lt.s32.totalorder %v381, 1
        %v422 = vsel %vm421, %v418, %v420
        %v423 = vsel %vm421, %v420, %v418
        %s424 = scalar_lea.vmem [#allocation2], 48
        %v425 = vld [vmem:[%s424] sm:$0xff]
        %v426 = vld [vmem:[%s424 + $0x8] sm:$0xff]
        %v427 = vmul.f32 %v423, %v425
        %v428 = vmul.f32 %v422, %v426
        %v429 = vadd.f32 %v415, %v427
        %v430 = vadd.f32 %v416, %v428
        %s431 = scalar_lea.vmem [#allocation2], 64
        %v432 = vld [vmem:[%s431] sm:$0xff]
        %v433 = vld [vmem:[%s431 + $0x8] sm:$0xff]
        %v434 = vmul.f32 %v372, %v432
        %v435 = vmul.f32 %v374, %v433
        %v436 = vadd.f32 %v429, %v434
        %v437 = vadd.f32 %v430, %v435
        %438 = vrot.lane.b32.xlu0 %v372, 127
        %v439 = vpop.permute.xlu0 %438
        %440 = vrot.lane.b32.xlu0 %v374, 127
        %v441 = vpop.permute.xlu0 %440
        %vm442 = vcmp.lt.s32.totalorder %v381, 127
        %v443 = vsel %vm442, %v439, %v441
        %v444 = vsel %vm442, %v441, %v439
        %s445 = scalar_lea.vmem [#allocation2], 80
        %v446 = vld [vmem:[%s445] sm:$0xff]
        %v447 = vld [vmem:[%s445 + $0x8] sm:$0xff]
        %v448 = vmul.f32 %v443, %v446
        %v449 = vmul.f32 %v444, %v447
        %v450 = vadd.f32 %v436, %v448
        %v451 = vadd.f32 %v437, %v449
        %452 = vrot.lane.b32.xlu0 %v372, 113
        %v453 = vpop.permute.xlu0 %452
        %454 = vrot.lane.b32.xlu0 %v374, 113
        %v455 = vpop.permute.xlu0 %454
        %vm456 = vcmp.lt.s32.totalorder %v381, 113
        %v457 = vsel %vm456, %v453, %v455
        %v458 = vsel %vm456, %v455, %v453
        %s459 = scalar_lea.vmem [#allocation2], 96
        %v460 = vld [vmem:[%s459] sm:$0xff]
        %v461 = vld [vmem:[%s459 + $0x8] sm:$0xff]
        %v462 = vmul.f32 %v457, %v460
        %v463 = vmul.f32 %v458, %v461
        %v464 = vadd.f32 %v450, %v462
        %v465 = vadd.f32 %v451, %v463
        %466 = vrot.lane.b32.xlu0 %v372, 112
        %v467 = vpop.permute.xlu0 %466
        %468 = vrot.lane.b32.xlu0 %v374, 112
        %v469 = vpop.permute.xlu0 %468
        %vm470 = vcmp.lt.s32.totalorder %v381, 112
        %v471 = vsel %vm470, %v467, %v469
        %v472 = vsel %vm470, %v469, %v467
        %s473 = scalar_lea.vmem [#allocation2], 112
        %v474 = vld [vmem:[%s473] sm:$0xff]
        %v475 = vld [vmem:[%s473 + $0x8] sm:$0xff]
        %v476 = vmul.f32 %v471, %v474
        %v477 = vmul.f32 %v472, %v475
        %v478 = vadd.f32 %v464, %v476
        %v479 = vadd.f32 %v465, %v477
        %480 = vrot.lane.b32.xlu0 %v372, 111
        %v481 = vpop.permute.xlu0 %480
        %482 = vrot.lane.b32.xlu0 %v374, 111
        %v483 = vpop.permute.xlu0 %482
        %vm484 = vcmp.lt.s32.totalorder %v381, 111
        %v485 = vsel %vm484, %v481, %v483
        %v486 = vsel %vm484, %v483, %v481
        %s487 = scalar_lea.vmem [#allocation2], 128
        %v488 = vld [vmem:[%s487] sm:$0xff]
        %v489 = vld [vmem:[%s487 + $0x8] sm:$0xff]
        %v490 = vmul.f32 %v485, %v488
        %v491 = vmul.f32 %v486, %v489
        %v492 = vadd.f32 %v478, %v490
        %v493 = vadd.f32 %v479, %v491
        %494 = vset.pattern.permute.xlu0 3
        %495 = vperm.xlu0 %494, %v219
        %v496 = vpop.permute.xlu0 %495
        %v498 = vadd.f32 %v492, %v496
        %v499 = vadd.f32 %v493, %v496
        %v502 = vrot.slane %v498, 4
        %v503 = vrot.slane %v499, 4
        %v506 = vmul.f32 %v498, %v502
        %v507 = vmul.f32 %v499, %v503
        %v508 = vsel %vm223, %v506, 0.0
        %v509 = vsel %vm223, %v507, 0.0
        %v510 = vadd.f32 %v508, %v509
        %511 = vadd.xlane.f32.xlu0 %v510
        %v512 = vpop.xlane.xlu0 %511
        %v513 = vrcp.pop 256.0
        %v514 = vmul.f32 %v512, %v513
        %515 = vrot.lane.b32.xlu0 %v219, 124
        %v516 = vpop.permute.xlu0 %515
        %v519 = vsel %vm295, %v216, 0
        %v522 = vsel %vm223, %v514, 0
        %524 = vmatprep.subr.mxu0 0.0
        %525 = vmatpush1.msra.mxu0 0.0
        %526 = vmatprep.subr.mxu0 0.0
        %527 = vmatpush1.msra.mxu0 0.0
        %528 = vmatprep.subr.mxu0 0.0
        %529 = vmatpush1.msra.mxu0 0.0
        %530 = vmatprep.subr.mxu0 0.0
        %531 = vmatpush1.msra.mxu0 0.0
        %532 = vmatprep.subr.mxu0 0.0
        %533 = vmatpush1.msra.mxu0 0.0
        %534 = vmatprep.subr.mxu0 0.0
        %535 = vmatpush1.msra.mxu0 0.0
        %536 = vmatprep.subr.mxu0 0.0
        %537 = vmatpush1.msra.mxu0 0.0
        %538 = vmatprep.subr.mxu0 0.0
        %539 = vmatpush1.msra.mxu0 0.0
        %540 = vmatprep.subr.mxu0 0.0
        %541 = vmatpush1.msra.mxu0 0.0
        %542 = vmatprep.subr.mxu0 0.0
        %543 = vmatpush1.msra.mxu0 0.0
        %544 = vmatprep.subr.mxu0 0.0
        %545 = vmatpush1.msra.mxu0 0.0
        %546 = vmatprep.subr.mxu0 0.0
        %547 = vmatpush1.msra.mxu0 0.0
        %548 = vmatprep.subr.mxu0 0.0
        %549 = vmatpush1.msra.mxu0 0.0
        %550 = vmatprep.subr.mxu0 0.0
        %551 = vmatpush1.msra.mxu0 0.0
        %552 = vmatprep.subr.mxu0 0.0
        %553 = vmatpush1.msra.mxu0 0.0
        %554 = vmatprep.subr.mxu0 0.0
        %555 = vmatpush1.msra.mxu0 %v522
        %556 = vmatprep.subr.mxu0 0.0
        %557 = vmatpush2.msra.mxu0 0.0
        %558 = vmatprep.subr.mxu0 0.0
        %559 = vmatpush2.msra.mxu0 0.0
        %560 = vmatprep.subr.mxu0 0.0
        %561 = vmatpush2.msra.mxu0 0.0
        %562 = vmatprep.subr.mxu0 0.0
        %563 = vmatpush2.msra.mxu0 0.0
        %564 = vmatprep.subr.mxu0 0.0
        %565 = vmatpush2.msra.mxu0 0.0
        %566 = vmatprep.subr.mxu0 0.0
        %567 = vmatpush2.msra.mxu0 0.0
        %568 = vmatprep.subr.mxu0 0.0
        %569 = vmatpush2.msra.mxu0 0.0
        %570 = vmatprep.subr.mxu0 0.0
        %571 = vmatpush2.msra.mxu0 0.0
        %572 = vmatprep.subr.mxu0 0.0
        %573 = vmatpush2.msra.mxu0 0.0
        %574 = vmatprep.subr.mxu0 0.0
        %575 = vmatpush2.msra.mxu0 0.0
        %576 = vmatprep.subr.mxu0 0.0
        %577 = vmatpush2.msra.mxu0 0.0
        %578 = vmatprep.subr.mxu0 0.0
        %579 = vmatpush2.msra.mxu0 0.0
        %580 = vmatprep.subr.mxu0 0.0
        %581 = vmatpush2.msra.mxu0 0.0
        %582 = vmatprep.subr.mxu0 0.0
        %583 = vmatpush2.msra.mxu0 0.0
        %584 = vmatprep.subr.mxu0 0.0
        %585 = vmatpush2.msra.mxu0 0.0
        %586 = vmatprep.subr.mxu0 0.0
        %587 = vmatpush2.msra.mxu0 0.0
        %588 = vmatprep.mubr.f32.mxu0 0.0
        %589 = vmatmul.mubr.f32.gmra.mxu0 %v519
        %v590 = vpop.f32.mrf.mxu0
        %v591 = vadd.f32 %v516, %v590
        %v592 = vpop.f32.mrf.mxu0
        %593 = vdwg.mxu0
        %595 = vset.pattern.permute.xlu0 0
        %596 = vperm.xlu0 %595, %v591
        %v597 = vpop.permute.xlu0 %596
        %v599 = vmul.f32 %v506, %v597
        %v600 = vmul.f32 %v507, %v597
        %601 = vset.pattern.permute.xlu0 5
        %602 = vperm.xlu0 %601, %v219
        %v603 = vpop.permute.xlu0 %602
        %v606 = vsel %vm295, %v217, 0
        %v609 = vsel %vm223, %v599, 0
        %v612 = vsel %vm223, %v600, 0
        %614 = vmatprep.subr.mxu0 0.0
        %615 = vmatpush1.msra.mxu0 0.0
        %616 = vmatprep.subr.mxu0 0.0
        %617 = vmatpush1.msra.mxu0 0.0
        %618 = vmatprep.subr.mxu0 0.0
        %619 = vmatpush1.msra.mxu0 0.0
        %620 = vmatprep.subr.mxu0 0.0
        %621 = vmatpush1.msra.mxu0 0.0
        %622 = vmatprep.subr.mxu0 0.0
        %623 = vmatpush1.msra.mxu0 0.0
        %624 = vmatprep.subr.mxu0 0.0
        %625 = vmatpush1.msra.mxu0 0.0
        %626 = vmatprep.subr.mxu0 0.0
        %627 = vmatpush1.msra.mxu0 0.0
        %628 = vmatprep.subr.mxu0 0.0
        %629 = vmatpush1.msra.mxu0 0.0
        %630 = vmatprep.subr.mxu0 0.0
        %631 = vmatpush1.msra.mxu0 0.0
        %632 = vmatprep.subr.mxu0 0.0
        %633 = vmatpush1.msra.mxu0 0.0
        %634 = vmatprep.subr.mxu0 0.0
        %635 = vmatpush1.msra.mxu0 0.0
        %636 = vmatprep.subr.mxu0 0.0
        %637 = vmatpush1.msra.mxu0 0.0
        %638 = vmatprep.subr.mxu0 0.0
        %639 = vmatpush1.msra.mxu0 0.0
        %640 = vmatprep.subr.mxu0 0.0
        %641 = vmatpush1.msra.mxu0 0.0
        %642 = vmatprep.subr.mxu0 0.0
        %643 = vmatpush1.msra.mxu0 0.0
        %644 = vmatprep.subr.mxu0 %v612
        %645 = vmatpush1.msra.mxu0 %v609
        %646 = vmatprep.subr.mxu0 0.0
        %647 = vmatpush2.msra.mxu0 0.0
        %648 = vmatprep.subr.mxu0 0.0
        %649 = vmatpush2.msra.mxu0 0.0
        %650 = vmatprep.subr.mxu0 0.0
        %651 = vmatpush2.msra.mxu0 0.0
        %652 = vmatprep.subr.mxu0 0.0
        %653 = vmatpush2.msra.mxu0 0.0
        %654 = vmatprep.subr.mxu0 0.0
        %655 = vmatpush2.msra.mxu0 0.0
        %656 = vmatprep.subr.mxu0 0.0
        %657 = vmatpush2.msra.mxu0 0.0
        %658 = vmatprep.subr.mxu0 0.0
        %659 = vmatpush2.msra.mxu0 0.0
        %660 = vmatprep.subr.mxu0 0.0
        %661 = vmatpush2.msra.mxu0 0.0
        %662 = vmatprep.subr.mxu0 0.0
        %663 = vmatpush2.msra.mxu0 0.0
        %664 = vmatprep.subr.mxu0 0.0
        %665 = vmatpush2.msra.mxu0 0.0
        %666 = vmatprep.subr.mxu0 0.0
        %667 = vmatpush2.msra.mxu0 0.0
        %668 = vmatprep.subr.mxu0 0.0
        %669 = vmatpush2.msra.mxu0 0.0
        %670 = vmatprep.subr.mxu0 0.0
        %671 = vmatpush2.msra.mxu0 0.0
        %672 = vmatprep.subr.mxu0 0.0
        %673 = vmatpush2.msra.mxu0 0.0
        %674 = vmatprep.subr.mxu0 0.0
        %675 = vmatpush2.msra.mxu0 0.0
        %676 = vmatprep.subr.mxu0 0.0
        %677 = vmatpush2.msra.mxu0 0.0
        %678 = vmatprep.mubr.f32.mxu0 0.0
        %679 = vmatmul.mubr.f32.gmra.mxu0 %v606
        %v680 = vpop.f32.mrf.mxu0
        %v681 = vadd.f32 %v603, %v680
        %v682 = vpop.f32.mrf.mxu0
        %v683 = vadd.f32 %v603, %v682
        %684 = vdwg.mxu0
        %685 = vset.pattern.permute.xlu0 6
        %686 = vperm.xlu0 %685, %v219
        %v687 = vpop.permute.xlu0 %686
        %v689 = vmul.f32 %v681, %v687
        %v690 = vmul.f32 %v683, %v687
        %v693 = vcombine.low %v689, %v690
        %v695 = vadd.f32 %v213, %v693
        %v697 = vcombine.high %v695, %v695
        %v699 = vsel %vm223, %v695, 0.0
        %v700 = vrot.slane %v699, 4
        %v701 = vadd.f32 %v699, %v700
        %v702 = vrot.slane %v701, 2
        %v703 = vadd.f32 %v701, %v702
        %v704 = vrot.slane %v703, 1
        %v705 = vadd.f32 %v703, %v704
        %v706 = vsel %vm223, %v697, 0.0
        %v707 = vrot.slane %v706, 4
        %v708 = vadd.f32 %v706, %v707
        %v709 = vrot.slane %v708, 2
        %v710 = vadd.f32 %v708, %v709
        %v711 = vrot.slane %v710, 1
        %v712 = vadd.f32 %v710, %v711
        %v713 = vmul.f32 %v705, %v238
        %v714 = vmul.f32 %v712, %v238
        %v717 = vcombine.low %v713, %v714
        %v719 = vsub.f32 %v695, %v717
        %v720 = vmul.f32 %v719, %v719
        %v722 = vcombine.high %v720, %v720
        %v724 = vsel %vm223, %v720, 0.0
        %v725 = vrot.slane %v724, 4
        %v726 = vadd.f32 %v724, %v725
        %v727 = vrot.slane %v726, 2
        %v728 = vadd.f32 %v726, %v727
        %v729 = vrot.slane %v728, 1
        %v730 = vadd.f32 %v728, %v729
        %v731 = vsel %vm223, %v722, 0.0
        %v732 = vrot.slane %v731, 4
        %v733 = vadd.f32 %v731, %v732
        %v734 = vrot.slane %v733, 2
        %v735 = vadd.f32 %v733, %v734
        %v736 = vrot.slane %v735, 1
        %v737 = vadd.f32 %v735, %v736
        %v738 = vmul.f32 %v730, %v238
        %v739 = vmul.f32 %v737, %v238
        %v740 = vadd.f32 %v738, 1e-06
        %v741 = vadd.f32 %v739, 1e-06
        %v742 = vrsqrt.pop %v740
        %v743 = vrsqrt.pop %v741
        %v746 = vcombine.low %v742, %v743
        %v748 = vmul.f32 %v719, %v746
        %749 = vset.pattern.permute.xlu0 7
        %750 = vperm.xlu0 %749, %v219
        %v751 = vpop.permute.xlu0 %750
        %v754 = vcombine.high %v748, %v748
        %v756 = vmul.f32 %v751, %v748
        %v757 = vmul.f32 %v751, %v754
        %758 = vset.pattern.permute.xlu0 8
        %759 = vperm.xlu0 %758, %v219
        %v760 = vpop.permute.xlu0 %759
        %v762 = vadd.f32 %v756, %v760
        %v763 = vadd.f32 %v757, %v760
        %764 = vset.pattern.permute.xlu0 9
        %765 = vperm.xlu0 %764, %v219
        %v766 = vpop.permute.xlu0 %765
        %v769 = vsel %vm295, %v215, 0
        %v772 = vsel %vm223, %v762, 0
        %v775 = vsel %vm223, %v763, 0
        %777 = vmatprep.subr.mxu0 0.0
        %778 = vmatpush1.msra.mxu0 0.0
        %779 = vmatprep.subr.mxu0 0.0
        %780 = vmatpush1.msra.mxu0 0.0
        %781 = vmatprep.subr.mxu0 0.0
        %782 = vmatpush1.msra.mxu0 0.0
        %783 = vmatprep.subr.mxu0 0.0
        %784 = vmatpush1.msra.mxu0 0.0
        %785 = vmatprep.subr.mxu0 0.0
        %786 = vmatpush1.msra.mxu0 0.0
        %787 = vmatprep.subr.mxu0 0.0
        %788 = vmatpush1.msra.mxu0 0.0
        %789 = vmatprep.subr.mxu0 0.0
        %790 = vmatpush1.msra.mxu0 0.0
        %791 = vmatprep.subr.mxu0 0.0
        %792 = vmatpush1.msra.mxu0 0.0
        %793 = vmatprep.subr.mxu0 0.0
        %794 = vmatpush1.msra.mxu0 0.0
        %795 = vmatprep.subr.mxu0 0.0
        %796 = vmatpush1.msra.mxu0 0.0
        %797 = vmatprep.subr.mxu0 0.0
        %798 = vmatpush1.msra.mxu0 0.0
        %799 = vmatprep.subr.mxu0 0.0
        %800 = vmatpush1.msra.mxu0 0.0
        %801 = vmatprep.subr.mxu0 0.0
        %802 = vmatpush1.msra.mxu0 0.0
        %803 = vmatprep.subr.mxu0 0.0
        %804 = vmatpush1.msra.mxu0 0.0
        %805 = vmatprep.subr.mxu0 0.0
        %806 = vmatpush1.msra.mxu0 0.0
        %807 = vmatprep.subr.mxu0 %v775
        %808 = vmatpush1.msra.mxu0 %v772
        %809 = vmatprep.subr.mxu0 0.0
        %810 = vmatpush2.msra.mxu0 0.0
        %811 = vmatprep.subr.mxu0 0.0
        %812 = vmatpush2.msra.mxu0 0.0
        %813 = vmatprep.subr.mxu0 0.0
        %814 = vmatpush2.msra.mxu0 0.0
        %815 = vmatprep.subr.mxu0 0.0
        %816 = vmatpush2.msra.mxu0 0.0
        %817 = vmatprep.subr.mxu0 0.0
        %818 = vmatpush2.msra.mxu0 0.0
        %819 = vmatprep.subr.mxu0 0.0
        %820 = vmatpush2.msra.mxu0 0.0
        %821 = vmatprep.subr.mxu0 0.0
        %822 = vmatpush2.msra.mxu0 0.0
        %823 = vmatprep.subr.mxu0 0.0
        %824 = vmatpush2.msra.mxu0 0.0
        %825 = vmatprep.subr.mxu0 0.0
        %826 = vmatpush2.msra.mxu0 0.0
        %827 = vmatprep.subr.mxu0 0.0
        %828 = vmatpush2.msra.mxu0 0.0
        %829 = vmatprep.subr.mxu0 0.0
        %830 = vmatpush2.msra.mxu0 0.0
        %831 = vmatprep.subr.mxu0 0.0
        %832 = vmatpush2.msra.mxu0 0.0
        %833 = vmatprep.subr.mxu0 0.0
        %834 = vmatpush2.msra.mxu0 0.0
        %835 = vmatprep.subr.mxu0 0.0
        %836 = vmatpush2.msra.mxu0 0.0
        %837 = vmatprep.subr.mxu0 0.0
        %838 = vmatpush2.msra.mxu0 0.0
        %839 = vmatprep.subr.mxu0 0.0
        %840 = vmatpush2.msra.mxu0 0.0
        %841 = vmatprep.mubr.f32.mxu0 0.0
        %842 = vmatmul.mubr.f32.gmra.mxu0 %v769
        %v843 = vpop.f32.mrf.mxu0
        %v844 = vadd.f32 %v766, %v843
        %v845 = vpop.f32.mrf.mxu0
        %v846 = vadd.f32 %v766, %v845
        %847 = vdwg.mxu0
        %v850 = vrot.slane %v844, 4
        %v851 = vrot.slane %v846, 4
        %v854 = vmul.f32 %v844, %v850
        %v855 = vmul.f32 %v846, %v851
        %856 = vset.pattern.permute.xlu0 10
        %857 = vperm.xlu0 %856, %v219
        %v858 = vpop.permute.xlu0 %857
        %v861 = vsel %vm295, %v218, 0
        %v864 = vsel %vm223, %v854, 0
        %v867 = vsel %vm223, %v855, 0
        %869 = vmatprep.subr.mxu0 0.0
        %870 = vmatpush1.msra.mxu0 0.0
        %871 = vmatprep.subr.mxu0 0.0
        %872 = vmatpush1.msra.mxu0 0.0
        %873 = vmatprep.subr.mxu0 0.0
        %874 = vmatpush1.msra.mxu0 0.0
        %875 = vmatprep.subr.mxu0 0.0
        %876 = vmatpush1.msra.mxu0 0.0
        %877 = vmatprep.subr.mxu0 0.0
        %878 = vmatpush1.msra.mxu0 0.0
        %879 = vmatprep.subr.mxu0 0.0
        %880 = vmatpush1.msra.mxu0 0.0
        %881 = vmatprep.subr.mxu0 0.0
        %882 = vmatpush1.msra.mxu0 0.0
        %883 = vmatprep.subr.mxu0 0.0
        %884 = vmatpush1.msra.mxu0 0.0
        %885 = vmatprep.subr.mxu0 0.0
        %886 = vmatpush1.msra.mxu0 0.0
        %887 = vmatprep.subr.mxu0 0.0
        %888 = vmatpush1.msra.mxu0 0.0
        %889 = vmatprep.subr.mxu0 0.0
        %890 = vmatpush1.msra.mxu0 0.0
        %891 = vmatprep.subr.mxu0 0.0
        %892 = vmatpush1.msra.mxu0 0.0
        %893 = vmatprep.subr.mxu0 0.0
        %894 = vmatpush1.msra.mxu0 0.0
        %895 = vmatprep.subr.mxu0 0.0
        %896 = vmatpush1.msra.mxu0 0.0
        %897 = vmatprep.subr.mxu0 0.0
        %898 = vmatpush1.msra.mxu0 0.0
        %899 = vmatprep.subr.mxu0 %v867
        %900 = vmatpush1.msra.mxu0 %v864
        %901 = vmatprep.subr.mxu0 0.0
        %902 = vmatpush2.msra.mxu0 0.0
        %903 = vmatprep.subr.mxu0 0.0
        %904 = vmatpush2.msra.mxu0 0.0
        %905 = vmatprep.subr.mxu0 0.0
        %906 = vmatpush2.msra.mxu0 0.0
        %907 = vmatprep.subr.mxu0 0.0
        %908 = vmatpush2.msra.mxu0 0.0
        %909 = vmatprep.subr.mxu0 0.0
        %910 = vmatpush2.msra.mxu0 0.0
        %911 = vmatprep.subr.mxu0 0.0
        %912 = vmatpush2.msra.mxu0 0.0
        %913 = vmatprep.subr.mxu0 0.0
        %914 = vmatpush2.msra.mxu0 0.0
        %915 = vmatprep.subr.mxu0 0.0
        %916 = vmatpush2.msra.mxu0 0.0
        %917 = vmatprep.subr.mxu0 0.0
        %918 = vmatpush2.msra.mxu0 0.0
        %919 = vmatprep.subr.mxu0 0.0
        %920 = vmatpush2.msra.mxu0 0.0
        %921 = vmatprep.subr.mxu0 0.0
        %922 = vmatpush2.msra.mxu0 0.0
        %923 = vmatprep.subr.mxu0 0.0
        %924 = vmatpush2.msra.mxu0 0.0
        %925 = vmatprep.subr.mxu0 0.0
        %926 = vmatpush2.msra.mxu0 0.0
        %927 = vmatprep.subr.mxu0 0.0
        %928 = vmatpush2.msra.mxu0 0.0
        %929 = vmatprep.subr.mxu0 0.0
        %930 = vmatpush2.msra.mxu0 0.0
        %931 = vmatprep.subr.mxu0 0.0
        %932 = vmatpush2.msra.mxu0 0.0
        %933 = vmatprep.mubr.f32.mxu0 0.0
        %934 = vmatmul.mubr.f32.gmra.mxu0 %v861
        %v935 = vpop.f32.mrf.mxu0
        %v936 = vadd.f32 %v858, %v935
        %v937 = vpop.f32.mrf.mxu0
        %v938 = vadd.f32 %v858, %v937
        %939 = vdwg.mxu0
        %940 = vset.pattern.permute.xlu0 11
        %941 = vperm.xlu0 %940, %v219
        %v942 = vpop.permute.xlu0 %941
        %v944 = vmul.f32 %v936, %v942
        %v945 = vmul.f32 %v938, %v942
        %v948 = vcombine.low %v944, %v945
        %v950 = vadd.f32 %v695, %v948
        %s951 = scalar_lea.vmem %s1, 40
        %v952 = vld [vmem:[%s951] sm:$0xff]
        %v953 = vld [vmem:[%s951 + $0x8] sm:$0xff]
        %v954 = vld [vmem:[%s951 + $0x10] sm:$0xf]
        %v955 = vld [vmem:[%s951 + $0x18] sm:$0xf]
        %v956 = vld [vmem:[%s951 + $0x20] sm:$0xf]
        %s957 = scalar_lea.vmem %s2, 8
        %v958 = vld [vmem:[%s957] sm:$0xff]
        %v960 = vcombine.high %v950, %v950
        %v962 = vsel %vm223, %v950, 0.0
        %v963 = vrot.slane %v962, 4
        %v964 = vadd.f32 %v962, %v963
        %v965 = vrot.slane %v964, 2
        %v966 = vadd.f32 %v964, %v965
        %v967 = vrot.slane %v966, 1
        %v968 = vadd.f32 %v966, %v967
        %v969 = vsel %vm223, %v960, 0.0
        %v970 = vrot.slane %v969, 4
        %v971 = vadd.f32 %v969, %v970
        %v972 = vrot.slane %v971, 2
        %v973 = vadd.f32 %v971, %v972
        %v974 = vrot.slane %v973, 1
        %v975 = vadd.f32 %v973, %v974
        %v976 = vmul.f32 %v968, %v238
        %v977 = vmul.f32 %v975, %v238
        %v980 = vcombine.low %v976, %v977
        %v982 = vsub.f32 %v950, %v980
        %v983 = vmul.f32 %v982, %v982
        %v985 = vcombine.high %v983, %v983
        %v987 = vsel %vm223, %v983, 0.0
        %v988 = vrot.slane %v987, 4
        %v989 = vadd.f32 %v987, %v988
        %v990 = vrot.slane %v989, 2
        %v991 = vadd.f32 %v989, %v990
        %v992 = vrot.slane %v991, 1
        %v993 = vadd.f32 %v991, %v992
        %v994 = vsel %vm223, %v985, 0.0
        %v995 = vrot.slane %v994, 4
        %v996 = vadd.f32 %v994, %v995
        %v997 = vrot.slane %v996, 2
        %v998 = vadd.f32 %v996, %v997
        %v999 = vrot.slane %v998, 1
        %v1000 = vadd.f32 %v998, %v999
        %v1001 = vmul.f32 %v993, %v238
        %v1002 = vmul.f32 %v1000, %v238
        %v1003 = vadd.f32 %v1001, 1e-06
        %v1004 = vadd.f32 %v1002, 1e-06
        %v1005 = vrsqrt.pop %v1003
        %v1006 = vrsqrt.pop %v1004
        %v1009 = vcombine.low %v1005, %v1006
        %v1011 = vmul.f32 %v982, %v1009
        %1013 = vset.pattern.permute.xlu0 0
        %1014 = vperm.xlu0 %1013, %v958
        %v1015 = vpop.permute.xlu0 %1014
        %v1018 = vcombine.high %v1011, %v1011
        %v1020 = vmul.f32 %v1015, %v1011
        %v1021 = vmul.f32 %v1015, %v1018
        %1022 = vset.pattern.permute.xlu0 1
        %1023 = vperm.xlu0 %1022, %v958
        %v1024 = vpop.permute.xlu0 %1023
        %v1026 = vadd.f32 %v1020, %v1024
        %v1027 = vadd.f32 %v1021, %v1024
        %1028 = vset.pattern.permute.xlu0 2
        %1029 = vperm.xlu0 %1028, %v958
        %v1030 = vpop.permute.xlu0 %1029
        %v1033 = vsel %vm295, %v952, 0
        %v1036 = vsel %vm223, %v1026, 0
        %v1039 = vsel %vm223, %v1027, 0
        %1041 = vmatprep.subr.mxu0 0.0
        %1042 = vmatpush1.msra.mxu0 0.0
        %1043 = vmatprep.subr.mxu0 0.0
        %1044 = vmatpush1.msra.mxu0 0.0
        %1045 = vmatprep.subr.mxu0 0.0
        %1046 = vmatpush1.msra.mxu0 0.0
        %1047 = vmatprep.subr.mxu0 0.0
        %1048 = vmatpush1.msra.mxu0 0.0
        %1049 = vmatprep.subr.mxu0 0.0
        %1050 = vmatpush1.msra.mxu0 0.0
        %1051 = vmatprep.subr.mxu0 0.0
        %1052 = vmatpush1.msra.mxu0 0.0
        %1053 = vmatprep.subr.mxu0 0.0
        %1054 = vmatpush1.msra.mxu0 0.0
        %1055 = vmatprep.subr.mxu0 0.0
        %1056 = vmatpush1.msra.mxu0 0.0
        %1057 = vmatprep.subr.mxu0 0.0
        %1058 = vmatpush1.msra.mxu0 0.0
        %1059 = vmatprep.subr.mxu0 0.0
        %1060 = vmatpush1.msra.mxu0 0.0
        %1061 = vmatprep.subr.mxu0 0.0
        %1062 = vmatpush1.msra.mxu0 0.0
        %1063 = vmatprep.subr.mxu0 0.0
        %1064 = vmatpush1.msra.mxu0 0.0
        %1065 = vmatprep.subr.mxu0 0.0
        %1066 = vmatpush1.msra.mxu0 0.0
        %1067 = vmatprep.subr.mxu0 0.0
        %1068 = vmatpush1.msra.mxu0 0.0
        %1069 = vmatprep.subr.mxu0 0.0
        %1070 = vmatpush1.msra.mxu0 0.0
        %1071 = vmatprep.subr.mxu0 %v1039
        %1072 = vmatpush1.msra.mxu0 %v1036
        %1073 = vmatprep.subr.mxu0 0.0
        %1074 = vmatpush2.msra.mxu0 0.0
        %1075 = vmatprep.subr.mxu0 0.0
        %1076 = vmatpush2.msra.mxu0 0.0
        %1077 = vmatprep.subr.mxu0 0.0
        %1078 = vmatpush2.msra.mxu0 0.0
        %1079 = vmatprep.subr.mxu0 0.0
        %1080 = vmatpush2.msra.mxu0 0.0
        %1081 = vmatprep.subr.mxu0 0.0
        %1082 = vmatpush2.msra.mxu0 0.0
        %1083 = vmatprep.subr.mxu0 0.0
        %1084 = vmatpush2.msra.mxu0 0.0
        %1085 = vmatprep.subr.mxu0 0.0
        %1086 = vmatpush2.msra.mxu0 0.0
        %1087 = vmatprep.subr.mxu0 0.0
        %1088 = vmatpush2.msra.mxu0 0.0
        %1089 = vmatprep.subr.mxu0 0.0
        %1090 = vmatpush2.msra.mxu0 0.0
        %1091 = vmatprep.subr.mxu0 0.0
        %1092 = vmatpush2.msra.mxu0 0.0
        %1093 = vmatprep.subr.mxu0 0.0
        %1094 = vmatpush2.msra.mxu0 0.0
        %1095 = vmatprep.subr.mxu0 0.0
        %1096 = vmatpush2.msra.mxu0 0.0
        %1097 = vmatprep.subr.mxu0 0.0
        %1098 = vmatpush2.msra.mxu0 0.0
        %1099 = vmatprep.subr.mxu0 0.0
        %1100 = vmatpush2.msra.mxu0 0.0
        %1101 = vmatprep.subr.mxu0 0.0
        %1102 = vmatpush2.msra.mxu0 0.0
        %1103 = vmatprep.subr.mxu0 0.0
        %1104 = vmatpush2.msra.mxu0 0.0
        %1105 = vmatprep.mubr.f32.mxu0 0.0
        %1106 = vmatmul.mubr.f32.gmra.mxu0 %v1033
        %v1107 = vpop.f32.mrf.mxu0
        %v1108 = vadd.f32 %v1030, %v1107
        %v1109 = vpop.f32.mrf.mxu0
        %v1110 = vadd.f32 %v1030, %v1109
        %1111 = vdwg.mxu0
        %1112 = vrot.lane.b32.xlu0 %v1108, 17
        %v1113 = vpop.permute.xlu0 %1112
        %1114 = vrot.lane.b32.xlu0 %v1110, 17
        %v1115 = vpop.permute.xlu0 %1114
        %v1116 = vsel %vm382, %v1113, %v1115
        %v1117 = vsel %vm382, %v1115, %v1113
        %s1118 = scalar_lea.vmem [#allocation2], 144
        %v1119 = vld [vmem:[%s1118] sm:$0xff]
        %v1120 = vld [vmem:[%s1118 + $0x8] sm:$0xff]
        %v1121 = vmul.f32 %v1117, %v1119
        %v1122 = vmul.f32 %v1116, %v1120
        %1123 = vrot.lane.b32.xlu0 %v1108, 16
        %v1124 = vpop.permute.xlu0 %1123
        %1125 = vrot.lane.b32.xlu0 %v1110, 16
        %v1126 = vpop.permute.xlu0 %1125
        %v1127 = vsel %vm393, %v1124, %v1126
        %v1128 = vsel %vm393, %v1126, %v1124
        %s1129 = scalar_lea.vmem [#allocation2], 160
        %v1130 = vld [vmem:[%s1129] sm:$0xff]
        %v1131 = vld [vmem:[%s1129 + $0x8] sm:$0xff]
        %v1132 = vmul.f32 %v1128, %v1130
        %v1133 = vmul.f32 %v1127, %v1131
        %v1134 = vadd.f32 %v1121, %v1132
        %v1135 = vadd.f32 %v1122, %v1133
        %1136 = vrot.lane.b32.xlu0 %v1108, 15
        %v1137 = vpop.permute.xlu0 %1136
        %1138 = vrot.lane.b32.xlu0 %v1110, 15
        %v1139 = vpop.permute.xlu0 %1138
        %v1140 = vsel %vm407, %v1137, %v1139
        %v1141 = vsel %vm407, %v1139, %v1137
        %s1142 = scalar_lea.vmem [#allocation2], 176
        %v1143 = vld [vmem:[%s1142] sm:$0xff]
        %v1144 = vld [vmem:[%s1142 + $0x8] sm:$0xff]
        %v1145 = vmul.f32 %v1141, %v1143
        %v1146 = vmul.f32 %v1140, %v1144
        %v1147 = vadd.f32 %v1134, %v1145
        %v1148 = vadd.f32 %v1135, %v1146
        %1149 = vrot.lane.b32.xlu0 %v1108, 1
        %v1150 = vpop.permute.xlu0 %1149
        %1151 = vrot.lane.b32.xlu0 %v1110, 1
        %v1152 = vpop.permute.xlu0 %1151
        %v1153 = vsel %vm421, %v1150, %v1152
        %v1154 = vsel %vm421, %v1152, %v1150
        %s1155 = scalar_lea.vmem [#allocation2], 192
        %v1156 = vld [vmem:[%s1155] sm:$0xff]
        %v1157 = vld [vmem:[%s1155 + $0x8] sm:$0xff]
        %v1158 = vmul.f32 %v1154, %v1156
        %v1159 = vmul.f32 %v1153, %v1157
        %v1160 = vadd.f32 %v1147, %v1158
        %v1161 = vadd.f32 %v1148, %v1159
        %s1162 = scalar_lea.vmem [#allocation2], 208
        %v1163 = vld [vmem:[%s1162] sm:$0xff]
        %v1164 = vld [vmem:[%s1162 + $0x8] sm:$0xff]
        %v1165 = vmul.f32 %v1108, %v1163
        %v1166 = vmul.f32 %v1110, %v1164
        %v1167 = vadd.f32 %v1160, %v1165
        %v1168 = vadd.f32 %v1161, %v1166
        %1169 = vrot.lane.b32.xlu0 %v1108, 127
        %v1170 = vpop.permute.xlu0 %1169
        %1171 = vrot.lane.b32.xlu0 %v1110, 127
        %v1172 = vpop.permute.xlu0 %1171
        %v1173 = vsel %vm442, %v1170, %v1172
        %v1174 = vsel %vm442, %v1172, %v1170
        %s1175 = scalar_lea.vmem [#allocation2], 224
        %v1176 = vld [vmem:[%s1175] sm:$0xff]
        %v1177 = vld [vmem:[%s1175 + $0x8] sm:$0xff]
        %v1178 = vmul.f32 %v1173, %v1176
        %v1179 = vmul.f32 %v1174, %v1177
        %v1180 = vadd.f32 %v1167, %v1178
        %v1181 = vadd.f32 %v1168, %v1179
        %1182 = vrot.lane.b32.xlu0 %v1108, 113
        %v1183 = vpop.permute.xlu0 %1182
        %1184 = vrot.lane.b32.xlu0 %v1110, 113
        %v1185 = vpop.permute.xlu0 %1184
        %v1186 = vsel %vm456, %v1183, %v1185
        %v1187 = vsel %vm456, %v1185, %v1183
        %s1188 = scalar_lea.vmem [#allocation2], 240
        %v1189 = vld [vmem:[%s1188] sm:$0xff]
        %v1190 = vld [vmem:[%s1188 + $0x8] sm:$0xff]
        %v1191 = vmul.f32 %v1186, %v1189
        %v1192 = vmul.f32 %v1187, %v1190
        %v1193 = vadd.f32 %v1180, %v1191
        %v1194 = vadd.f32 %v1181, %v1192
        %1195 = vrot.lane.b32.xlu0 %v1108, 112
        %v1196 = vpop.permute.xlu0 %1195
        %1197 = vrot.lane.b32.xlu0 %v1110, 112
        %v1198 = vpop.permute.xlu0 %1197
        %v1199 = vsel %vm470, %v1196, %v1198
        %v1200 = vsel %vm470, %v1198, %v1196
        %s1201 = scalar_lea.vmem [#allocation2], 256
        %v1202 = vld [vmem:[%s1201] sm:$0xff]
        %v1203 = vld [vmem:[%s1201 + $0x8] sm:$0xff]
        %v1204 = vmul.f32 %v1199, %v1202
        %v1205 = vmul.f32 %v1200, %v1203
        %v1206 = vadd.f32 %v1193, %v1204
        %v1207 = vadd.f32 %v1194, %v1205
        %1208 = vrot.lane.b32.xlu0 %v1108, 111
        %v1209 = vpop.permute.xlu0 %1208
        %1210 = vrot.lane.b32.xlu0 %v1110, 111
        %v1211 = vpop.permute.xlu0 %1210
        %v1212 = vsel %vm484, %v1209, %v1211
        %v1213 = vsel %vm484, %v1211, %v1209
        %s1214 = scalar_lea.vmem [#allocation2], 272
        %v1215 = vld [vmem:[%s1214] sm:$0xff]
        %v1216 = vld [vmem:[%s1214 + $0x8] sm:$0xff]
        %v1217 = vmul.f32 %v1212, %v1215
        %v1218 = vmul.f32 %v1213, %v1216
        %v1219 = vadd.f32 %v1206, %v1217
        %v1220 = vadd.f32 %v1207, %v1218
        %1221 = vset.pattern.permute.xlu0 3
        %1222 = vperm.xlu0 %1221, %v958
        %v1223 = vpop.permute.xlu0 %1222
        %v1225 = vadd.f32 %v1219, %v1223
        %v1226 = vadd.f32 %v1220, %v1223
        %v1229 = vrot.slane %v1225, 4
        %v1230 = vrot.slane %v1226, 4
        %v1233 = vmul.f32 %v1225, %v1229
        %v1234 = vmul.f32 %v1226, %v1230
        %v1235 = vsel %vm223, %v1233, 0.0
        %v1236 = vsel %vm223, %v1234, 0.0
        %v1237 = vadd.f32 %v1235, %v1236
        %1238 = vadd.xlane.f32.xlu0 %v1237
        %v1239 = vpop.xlane.xlu0 %1238
        %v1240 = vmul.f32 %v1239, %v513
        %1241 = vrot.lane.b32.xlu0 %v958, 124
        %v1242 = vpop.permute.xlu0 %1241
        %v1245 = vsel %vm295, %v954, 0
        %v1248 = vsel %vm223, %v1240, 0
        %1250 = vmatprep.subr.mxu0 0.0
        %1251 = vmatpush1.msra.mxu0 0.0
        %1252 = vmatprep.subr.mxu0 0.0
        %1253 = vmatpush1.msra.mxu0 0.0
        %1254 = vmatprep.subr.mxu0 0.0
        %1255 = vmatpush1.msra.mxu0 0.0
        %1256 = vmatprep.subr.mxu0 0.0
        %1257 = vmatpush1.msra.mxu0 0.0
        %1258 = vmatprep.subr.mxu0 0.0
        %1259 = vmatpush1.msra.mxu0 0.0
        %1260 = vmatprep.subr.mxu0 0.0
        %1261 = vmatpush1.msra.mxu0 0.0
        %1262 = vmatprep.subr.mxu0 0.0
        %1263 = vmatpush1.msra.mxu0 0.0
        %1264 = vmatprep.subr.mxu0 0.0
        %1265 = vmatpush1.msra.mxu0 0.0
        %1266 = vmatprep.subr.mxu0 0.0
        %1267 = vmatpush1.msra.mxu0 0.0
        %1268 = vmatprep.subr.mxu0 0.0
        %1269 = vmatpush1.msra.mxu0 0.0
        %1270 = vmatprep.subr.mxu0 0.0
        %1271 = vmatpush1.msra.mxu0 0.0
        %1272 = vmatprep.subr.mxu0 0.0
        %1273 = vmatpush1.msra.mxu0 0.0
        %1274 = vmatprep.subr.mxu0 0.0
        %1275 = vmatpush1.msra.mxu0 0.0
        %1276 = vmatprep.subr.mxu0 0.0
        %1277 = vmatpush1.msra.mxu0 0.0
        %1278 = vmatprep.subr.mxu0 0.0
        %1279 = vmatpush1.msra.mxu0 0.0
        %1280 = vmatprep.subr.mxu0 0.0
        %1281 = vmatpush1.msra.mxu0 %v1248
        %1282 = vmatprep.subr.mxu0 0.0
        %1283 = vmatpush2.msra.mxu0 0.0
        %1284 = vmatprep.subr.mxu0 0.0
        %1285 = vmatpush2.msra.mxu0 0.0
        %1286 = vmatprep.subr.mxu0 0.0
        %1287 = vmatpush2.msra.mxu0 0.0
        %1288 = vmatprep.subr.mxu0 0.0
        %1289 = vmatpush2.msra.mxu0 0.0
        %1290 = vmatprep.subr.mxu0 0.0
        %1291 = vmatpush2.msra.mxu0 0.0
        %1292 = vmatprep.subr.mxu0 0.0
        %1293 = vmatpush2.msra.mxu0 0.0
        %1294 = vmatprep.subr.mxu0 0.0
        %1295 = vmatpush2.msra.mxu0 0.0
        %1296 = vmatprep.subr.mxu0 0.0
        %1297 = vmatpush2.msra.mxu0 0.0
        %1298 = vmatprep.subr.mxu0 0.0
        %1299 = vmatpush2.msra.mxu0 0.0
        %1300 = vmatprep.subr.mxu0 0.0
        %1301 = vmatpush2.msra.mxu0 0.0
        %1302 = vmatprep.subr.mxu0 0.0
        %1303 = vmatpush2.msra.mxu0 0.0
        %1304 = vmatprep.subr.mxu0 0.0
        %1305 = vmatpush2.msra.mxu0 0.0
        %1306 = vmatprep.subr.mxu0 0.0
        %1307 = vmatpush2.msra.mxu0 0.0
        %1308 = vmatprep.subr.mxu0 0.0
        %1309 = vmatpush2.msra.mxu0 0.0
        %1310 = vmatprep.subr.mxu0 0.0
        %1311 = vmatpush2.msra.mxu0 0.0
        %1312 = vmatprep.subr.mxu0 0.0
        %1313 = vmatpush2.msra.mxu0 0.0
        %1314 = vmatprep.mubr.f32.mxu0 0.0
        %1315 = vmatmul.mubr.f32.gmra.mxu0 %v1245
        %v1316 = vpop.f32.mrf.mxu0
        %v1317 = vadd.f32 %v1242, %v1316
        %v1318 = vpop.f32.mrf.mxu0
        %1319 = vdwg.mxu0
        %1321 = vset.pattern.permute.xlu0 0
        %1322 = vperm.xlu0 %1321, %v1317
        %v1323 = vpop.permute.xlu0 %1322
        %v1325 = vmul.f32 %v1233, %v1323
        %v1326 = vmul.f32 %v1234, %v1323
        %1327 = vset.pattern.permute.xlu0 5
        %1328 = vperm.xlu0 %1327, %v958
        %v1329 = vpop.permute.xlu0 %1328
        %v1332 = vsel %vm295, %v955, 0
        %v1335 = vsel %vm223, %v1325, 0
        %v1338 = vsel %vm223, %v1326, 0
        %1340 = vmatprep.subr.mxu0 0.0
        %1341 = vmatpush1.msra.mxu0 0.0
        %1342 = vmatprep.subr.mxu0 0.0
        %1343 = vmatpush1.msra.mxu0 0.0
        %1344 = vmatprep.subr.mxu0 0.0
        %1345 = vmatpush1.msra.mxu0 0.0
        %1346 = vmatprep.subr.mxu0 0.0
        %1347 = vmatpush1.msra.mxu0 0.0
        %1348 = vmatprep.subr.mxu0 0.0
        %1349 = vmatpush1.msra.mxu0 0.0
        %1350 = vmatprep.subr.mxu0 0.0
        %1351 = vmatpush1.msra.mxu0 0.0
        %1352 = vmatprep.subr.mxu0 0.0
        %1353 = vmatpush1.msra.mxu0 0.0
        %1354 = vmatprep.subr.mxu0 0.0
        %1355 = vmatpush1.msra.mxu0 0.0
        %1356 = vmatprep.subr.mxu0 0.0
        %1357 = vmatpush1.msra.mxu0 0.0
        %1358 = vmatprep.subr.mxu0 0.0
        %1359 = vmatpush1.msra.mxu0 0.0
        %1360 = vmatprep.subr.mxu0 0.0
        %1361 = vmatpush1.msra.mxu0 0.0
        %1362 = vmatprep.subr.mxu0 0.0
        %1363 = vmatpush1.msra.mxu0 0.0
        %1364 = vmatprep.subr.mxu0 0.0
        %1365 = vmatpush1.msra.mxu0 0.0
        %1366 = vmatprep.subr.mxu0 0.0
        %1367 = vmatpush1.msra.mxu0 0.0
        %1368 = vmatprep.subr.mxu0 0.0
        %1369 = vmatpush1.msra.mxu0 0.0
        %1370 = vmatprep.subr.mxu0 %v1338
        %1371 = vmatpush1.msra.mxu0 %v1335
        %1372 = vmatprep.subr.mxu0 0.0
        %1373 = vmatpush2.msra.mxu0 0.0
        %1374 = vmatprep.subr.mxu0 0.0
        %1375 = vmatpush2.msra.mxu0 0.0
        %1376 = vmatprep.subr.mxu0 0.0
        %1377 = vmatpush2.msra.mxu0 0.0
        %1378 = vmatprep.subr.mxu0 0.0
        %1379 = vmatpush2.msra.mxu0 0.0
        %1380 = vmatprep.subr.mxu0 0.0
        %1381 = vmatpush2.msra.mxu0 0.0
        %1382 = vmatprep.subr.mxu0 0.0
        %1383 = vmatpush2.msra.mxu0 0.0
        %1384 = vmatprep.subr.mxu0 0.0
        %1385 = vmatpush2.msra.mxu0 0.0
        %1386 = vmatprep.subr.mxu0 0.0
        %1387 = vmatpush2.msra.mxu0 0.0
        %1388 = vmatprep.subr.mxu0 0.0
        %1389 = vmatpush2.msra.mxu0 0.0
        %1390 = vmatprep.subr.mxu0 0.0
        %1391 = vmatpush2.msra.mxu0 0.0
        %1392 = vmatprep.subr.mxu0 0.0
        %1393 = vmatpush2.msra.mxu0 0.0
        %1394 = vmatprep.subr.mxu0 0.0
        %1395 = vmatpush2.msra.mxu0 0.0
        %1396 = vmatprep.subr.mxu0 0.0
        %1397 = vmatpush2.msra.mxu0 0.0
        %1398 = vmatprep.subr.mxu0 0.0
        %1399 = vmatpush2.msra.mxu0 0.0
        %1400 = vmatprep.subr.mxu0 0.0
        %1401 = vmatpush2.msra.mxu0 0.0
        %1402 = vmatprep.subr.mxu0 0.0
        %1403 = vmatpush2.msra.mxu0 0.0
        %1404 = vmatprep.mubr.f32.mxu0 0.0
        %1405 = vmatmul.mubr.f32.gmra.mxu0 %v1332
        %v1406 = vpop.f32.mrf.mxu0
        %v1407 = vadd.f32 %v1329, %v1406
        %v1408 = vpop.f32.mrf.mxu0
        %v1409 = vadd.f32 %v1329, %v1408
        %1410 = vdwg.mxu0
        %1411 = vset.pattern.permute.xlu0 6
        %1412 = vperm.xlu0 %1411, %v958
        %v1413 = vpop.permute.xlu0 %1412
        %v1415 = vmul.f32 %v1407, %v1413
        %v1416 = vmul.f32 %v1409, %v1413
        %v1419 = vcombine.low %v1415, %v1416
        %v1421 = vadd.f32 %v950, %v1419
        %v1423 = vcombine.high %v1421, %v1421
        %v1425 = vsel %vm223, %v1421, 0.0
        %v1426 = vrot.slane %v1425, 4
        %v1427 = vadd.f32 %v1425, %v1426
        %v1428 = vrot.slane %v1427, 2
        %v1429 = vadd.f32 %v1427, %v1428
        %v1430 = vrot.slane %v1429, 1
        %v1431 = vadd.f32 %v1429, %v1430
        %v1432 = vsel %vm223, %v1423, 0.0
        %v1433 = vrot.slane %v1432, 4
        %v1434 = vadd.f32 %v1432, %v1433
        %v1435 = vrot.slane %v1434, 2
        %v1436 = vadd.f32 %v1434, %v1435
        %v1437 = vrot.slane %v1436, 1
        %v1438 = vadd.f32 %v1436, %v1437
        %v1439 = vmul.f32 %v1431, %v238
        %v1440 = vmul.f32 %v1438, %v238
        %v1443 = vcombine.low %v1439, %v1440
        %v1445 = vsub.f32 %v1421, %v1443
        %v1446 = vmul.f32 %v1445, %v1445
        %v1448 = vcombine.high %v1446, %v1446
        %v1450 = vsel %vm223, %v1446, 0.0
        %v1451 = vrot.slane %v1450, 4
        %v1452 = vadd.f32 %v1450, %v1451
        %v1453 = vrot.slane %v1452, 2
        %v1454 = vadd.f32 %v1452, %v1453
        %v1455 = vrot.slane %v1454, 1
        %v1456 = vadd.f32 %v1454, %v1455
        %v1457 = vsel %vm223, %v1448, 0.0
        %v1458 = vrot.slane %v1457, 4
        %v1459 = vadd.f32 %v1457, %v1458
        %v1460 = vrot.slane %v1459, 2
        %v1461 = vadd.f32 %v1459, %v1460
        %v1462 = vrot.slane %v1461, 1
        %v1463 = vadd.f32 %v1461, %v1462
        %v1464 = vmul.f32 %v1456, %v238
        %v1465 = vmul.f32 %v1463, %v238
        %v1466 = vadd.f32 %v1464, 1e-06
        %v1467 = vadd.f32 %v1465, 1e-06
        %v1468 = vrsqrt.pop %v1466
        %v1469 = vrsqrt.pop %v1467
        %v1472 = vcombine.low %v1468, %v1469
        %v1474 = vmul.f32 %v1445, %v1472
        %1475 = vset.pattern.permute.xlu0 7
        %1476 = vperm.xlu0 %1475, %v958
        %v1477 = vpop.permute.xlu0 %1476
        %v1480 = vcombine.high %v1474, %v1474
        %v1482 = vmul.f32 %v1477, %v1474
        %v1483 = vmul.f32 %v1477, %v1480
        %1484 = vset.pattern.permute.xlu0 8
        %1485 = vperm.xlu0 %1484, %v958
        %v1486 = vpop.permute.xlu0 %1485
        %v1488 = vadd.f32 %v1482, %v1486
        %v1489 = vadd.f32 %v1483, %v1486
        %1490 = vset.pattern.permute.xlu0 9
        %1491 = vperm.xlu0 %1490, %v958
        %v1492 = vpop.permute.xlu0 %1491
        %v1495 = vsel %vm295, %v953, 0
        %v1498 = vsel %vm223, %v1488, 0
        %v1501 = vsel %vm223, %v1489, 0
        %1503 = vmatprep.subr.mxu0 0.0
        %1504 = vmatpush1.msra.mxu0 0.0
        %1505 = vmatprep.subr.mxu0 0.0
        %1506 = vmatpush1.msra.mxu0 0.0
        %1507 = vmatprep.subr.mxu0 0.0
        %1508 = vmatpush1.msra.mxu0 0.0
        %1509 = vmatprep.subr.mxu0 0.0
        %1510 = vmatpush1.msra.mxu0 0.0
        %1511 = vmatprep.subr.mxu0 0.0
        %1512 = vmatpush1.msra.mxu0 0.0
        %1513 = vmatprep.subr.mxu0 0.0
        %1514 = vmatpush1.msra.mxu0 0.0
        %1515 = vmatprep.subr.mxu0 0.0
        %1516 = vmatpush1.msra.mxu0 0.0
        %1517 = vmatprep.subr.mxu0 0.0
        %1518 = vmatpush1.msra.mxu0 0.0
        %1519 = vmatprep.subr.mxu0 0.0
        %1520 = vmatpush1.msra.mxu0 0.0
        %1521 = vmatprep.subr.mxu0 0.0
        %1522 = vmatpush1.msra.mxu0 0.0
        %1523 = vmatprep.subr.mxu0 0.0
        %1524 = vmatpush1.msra.mxu0 0.0
        %1525 = vmatprep.subr.mxu0 0.0
        %1526 = vmatpush1.msra.mxu0 0.0
        %1527 = vmatprep.subr.mxu0 0.0
        %1528 = vmatpush1.msra.mxu0 0.0
        %1529 = vmatprep.subr.mxu0 0.0
        %1530 = vmatpush1.msra.mxu0 0.0
        %1531 = vmatprep.subr.mxu0 0.0
        %1532 = vmatpush1.msra.mxu0 0.0
        %1533 = vmatprep.subr.mxu0 %v1501
        %1534 = vmatpush1.msra.mxu0 %v1498
        %1535 = vmatprep.subr.mxu0 0.0
        %1536 = vmatpush2.msra.mxu0 0.0
        %1537 = vmatprep.subr.mxu0 0.0
        %1538 = vmatpush2.msra.mxu0 0.0
        %1539 = vmatprep.subr.mxu0 0.0
        %1540 = vmatpush2.msra.mxu0 0.0
        %1541 = vmatprep.subr.mxu0 0.0
        %1542 = vmatpush2.msra.mxu0 0.0
        %1543 = vmatprep.subr.mxu0 0.0
        %1544 = vmatpush2.msra.mxu0 0.0
        %1545 = vmatprep.subr.mxu0 0.0
        %1546 = vmatpush2.msra.mxu0 0.0
        %1547 = vmatprep.subr.mxu0 0.0
        %1548 = vmatpush2.msra.mxu0 0.0
        %1549 = vmatprep.subr.mxu0 0.0
        %1550 = vmatpush2.msra.mxu0 0.0
        %1551 = vmatprep.subr.mxu0 0.0
        %1552 = vmatpush2.msra.mxu0 0.0
        %1553 = vmatprep.subr.mxu0 0.0
        %1554 = vmatpush2.msra.mxu0 0.0
        %1555 = vmatprep.subr.mxu0 0.0
        %1556 = vmatpush2.msra.mxu0 0.0
        %1557 = vmatprep.subr.mxu0 0.0
        %1558 = vmatpush2.msra.mxu0 0.0
        %1559 = vmatprep.subr.mxu0 0.0
        %1560 = vmatpush2.msra.mxu0 0.0
        %1561 = vmatprep.subr.mxu0 0.0
        %1562 = vmatpush2.msra.mxu0 0.0
        %1563 = vmatprep.subr.mxu0 0.0
        %1564 = vmatpush2.msra.mxu0 0.0
        %1565 = vmatprep.subr.mxu0 0.0
        %1566 = vmatpush2.msra.mxu0 0.0
        %1567 = vmatprep.mubr.f32.mxu0 0.0
        %1568 = vmatmul.mubr.f32.gmra.mxu0 %v1495
        %v1569 = vpop.f32.mrf.mxu0
        %v1570 = vadd.f32 %v1492, %v1569
        %v1571 = vpop.f32.mrf.mxu0
        %v1572 = vadd.f32 %v1492, %v1571
        %1573 = vdwg.mxu0
        %v1576 = vrot.slane %v1570, 4
        %v1577 = vrot.slane %v1572, 4
        %v1580 = vmul.f32 %v1570, %v1576
        %v1581 = vmul.f32 %v1572, %v1577
        %1582 = vset.pattern.permute.xlu0 10
        %1583 = vperm.xlu0 %1582, %v958
        %v1584 = vpop.permute.xlu0 %1583
        %v1587 = vsel %vm295, %v956, 0
        %v1590 = vsel %vm223, %v1580, 0
        %v1593 = vsel %vm223, %v1581, 0
        %1595 = vmatprep.subr.mxu0 0.0
        %1596 = vmatpush1.msra.mxu0 0.0
        %1597 = vmatprep.subr.mxu0 0.0
        %1598 = vmatpush1.msra.mxu0 0.0
        %1599 = vmatprep.subr.mxu0 0.0
        %1600 = vmatpush1.msra.mxu0 0.0
        %1601 = vmatprep.subr.mxu0 0.0
        %1602 = vmatpush1.msra.mxu0 0.0
        %1603 = vmatprep.subr.mxu0 0.0
        %1604 = vmatpush1.msra.mxu0 0.0
        %1605 = vmatprep.subr.mxu0 0.0
        %1606 = vmatpush1.msra.mxu0 0.0
        %1607 = vmatprep.subr.mxu0 0.0
        %1608 = vmatpush1.msra.mxu0 0.0
        %1609 = vmatprep.subr.mxu0 0.0
        %1610 = vmatpush1.msra.mxu0 0.0
        %1611 = vmatprep.subr.mxu0 0.0
        %1612 = vmatpush1.msra.mxu0 0.0
        %1613 = vmatprep.subr.mxu0 0.0
        %1614 = vmatpush1.msra.mxu0 0.0
        %1615 = vmatprep.subr.mxu0 0.0
        %1616 = vmatpush1.msra.mxu0 0.0
        %1617 = vmatprep.subr.mxu0 0.0
        %1618 = vmatpush1.msra.mxu0 0.0
        %1619 = vmatprep.subr.mxu0 0.0
        %1620 = vmatpush1.msra.mxu0 0.0
        %1621 = vmatprep.subr.mxu0 0.0
        %1622 = vmatpush1.msra.mxu0 0.0
        %1623 = vmatprep.subr.mxu0 0.0
        %1624 = vmatpush1.msra.mxu0 0.0
        %1625 = vmatprep.subr.mxu0 %v1593
        %1626 = vmatpush1.msra.mxu0 %v1590
        %1627 = vmatprep.subr.mxu0 0.0
        %1628 = vmatpush2.msra.mxu0 0.0
        %1629 = vmatprep.subr.mxu0 0.0
        %1630 = vmatpush2.msra.mxu0 0.0
        %1631 = vmatprep.subr.mxu0 0.0
        %1632 = vmatpush2.msra.mxu0 0.0
        %1633 = vmatprep.subr.mxu0 0.0
        %1634 = vmatpush2.msra.mxu0 0.0
        %1635 = vmatprep.subr.mxu0 0.0
        %1636 = vmatpush2.msra.mxu0 0.0
        %1637 = vmatprep.subr.mxu0 0.0
        %1638 = vmatpush2.msra.mxu0 0.0
        %1639 = vmatprep.subr.mxu0 0.0
        %1640 = vmatpush2.msra.mxu0 0.0
        %1641 = vmatprep.subr.mxu0 0.0
        %1642 = vmatpush2.msra.mxu0 0.0
        %1643 = vmatprep.subr.mxu0 0.0
        %1644 = vmatpush2.msra.mxu0 0.0
        %1645 = vmatprep.subr.mxu0 0.0
        %1646 = vmatpush2.msra.mxu0 0.0
        %1647 = vmatprep.subr.mxu0 0.0
        %1648 = vmatpush2.msra.mxu0 0.0
        %1649 = vmatprep.subr.mxu0 0.0
        %1650 = vmatpush2.msra.mxu0 0.0
        %1651 = vmatprep.subr.mxu0 0.0
        %1652 = vmatpush2.msra.mxu0 0.0
        %1653 = vmatprep.subr.mxu0 0.0
        %1654 = vmatpush2.msra.mxu0 0.0
        %1655 = vmatprep.subr.mxu0 0.0
        %1656 = vmatpush2.msra.mxu0 0.0
        %1657 = vmatprep.subr.mxu0 0.0
        %1658 = vmatpush2.msra.mxu0 0.0
        %1659 = vmatprep.mubr.f32.mxu0 0.0
        %1660 = vmatmul.mubr.f32.gmra.mxu0 %v1587
        %v1661 = vpop.f32.mrf.mxu0
        %v1662 = vadd.f32 %v1584, %v1661
        %v1663 = vpop.f32.mrf.mxu0
        %v1664 = vadd.f32 %v1584, %v1663
        %1665 = vdwg.mxu0
        %1666 = vset.pattern.permute.xlu0 11
        %1667 = vperm.xlu0 %1666, %v958
        %v1668 = vpop.permute.xlu0 %1667
        %v1670 = vmul.f32 %v1662, %v1668
        %v1671 = vmul.f32 %v1664, %v1668
        %v1674 = vcombine.low %v1670, %v1671
        %v1676 = vadd.f32 %v1421, %v1674
        %1677 = vst [vmem:[%s212] sm:$0xff] %v1676
        %p1678 = scmp.lt.s32.totalorder %s16, 1
        %s1679 = scalar_select %p1678, %s16, 1
        %s1680 = smul.addr %s1679, 2
        %s1681 = smul.addr %s1680, 4
        %s1682 = scalar_lea.vmem %s4, %s1681
        // Predicated region
        $region41: #{naf_prox_net_forward.1} parent=35 // pred_check
          %p1683 = pneg %p123
        $region42: #{naf_prox_net_forward.1} parent=35 // pred_check_branch
          %1685 = sbr.rel (%p1683) target = $region44
        $region43: #{naf_prox_net_forward.1} parent=35 // pred_region
          _
        $region44: #{naf_prox_net_forward.1} parent=35 // pred_fallthru
          _
      $region36: #{naf_prox_net_forward.1} parent=5 // pred_fallthru
        _
      %p1686 = scmp.le.s32.totalorder 2, %s11
      // Predicated region
      $region45: #{naf_prox_net_forward.1} parent=5 // pred_check
        %p1687 = pneg %p1686
      $region46: #{naf_prox_net_forward.1} parent=5 // pred_check_branch
        %1689 = sbr.rel (%p1687) target = $region48
      $region47: #{naf_prox_net_forward.1} parent=5 // pred_region
        %s1690 = ssub.s32 %s11, 2
        // Predicated region
        $region49: #{naf_prox_net_forward.1} parent=47 // pred_check
          %p1691 = pneg %p129
        $region50: #{naf_prox_net_forward.1} parent=47 // pred_check_branch
          %1693 = sbr.rel (%p1691) target = $region52
        $region51: #{naf_prox_net_forward.1} parent=47 // pred_region
          %p1694 = scmp.lt.s32.totalorder %s17, 1
          %s1695 = scalar_select %p1694, %s17, 1
          %s1696 = smul.addr %s1695, 2
          %s1697 = smul.addr %s1696, 4
          %s1698 = scalar_lea.vmem %s4, %s1697
        $region52: #{naf_prox_net_forward.1} parent=47 // pred_fallthru
          _
      $region48: #{naf_prox_net_forward.1} parent=5 // pred_fallthru
        _
    $region6: #{naf_prox_net_forward.1} parent=1 // loop_footer
      %s15 = sadd.s32 1, %s11
    $region7: #{naf_prox_net_forward.1} parent=1 // loop_footer_branch
      %10 = sbr.rel target = $region3
    $region8: #{naf_prox_net_forward.1} parent=1 // loop_exit
      _
    %1699 = vsyncpa [#allocation3], 1
    %s1700 = scalar_lea.sflag [#allocation3], 1
    %1701 = vsyncpa %s1700, 1

</llo_original>
